<compile_context>
chip_gen: v7x
topology: tpu7x:2x2x1
jax: 0.10.0
libtpu: 0.0.40
codegen_flags: <defaults>
</compile_context>

<pallas_src>
import jax
import jax.numpy as jnp
from jax.experimental import pallas as pl
from jax.experimental.pallas import tpu as pltpu

# torch picks shift_direction = +/-1 at random in __init__; fixed here.
SHIFT_DIRECTION = 1

I_DIM = 512                          # output channels
J_DIM = 512                          # input channels
O_DIM = 7                            # spatial rows
N_DIM = 7                            # spatial cols (3-tap window axis)
K_TAPS = 3
L_DIM = 2
M_SPATIAL = O_DIM * N_DIM            # 49
K_CONTRACT = J_DIM * L_DIM * K_TAPS  # 3072

_BM = 128                            # output-channel tile -> grid of 4 parallel blocks


def _wz_matmul_kernel(w_ref, z_ref, o_ref):
    # (BM, 3072) @ (3072, 49) -> (BM, 49); full K per step, no accumulator.
    o_ref[...] = jnp.dot(w_ref[...], z_ref[...],
                         preferred_element_type=jnp.float32)


def _wz_matmul(w2, z):
    m, k = w2.shape                  # (512, 3072)
    _, n = z.shape                   # (3072, 49)
    grid = (m // _BM,)
    return pl.pallas_call(
        _wz_matmul_kernel,
        out_shape=jax.ShapeDtypeStruct((m, n), jnp.float32),
        grid=grid,
        in_specs=[
            pl.BlockSpec((_BM, k), lambda i: (i, 0)),   # 1.5 MB weight tile / step
            pl.BlockSpec((k, n), lambda i: (0, 0)),     # Z stays resident in VMEM
        ],
        out_specs=pl.BlockSpec((_BM, n), lambda i: (i, 0)),
        compiler_params=pltpu.CompilerParams(
            dimension_semantics=("parallel",)),
    )(w2, z)


def kernel_generated_6_forward(x, w, shift=SHIFT_DIRECTION):
    """x: (1,512,7,7) f32, w: (512,512,2,3) f32 -> (1,512,7,7) f32."""
    x0 = x.reshape(J_DIM, O_DIM, N_DIM)
    # Free reshape of the parameter: W[i, j*6 + l*3 + k] = w[i, j, l, k].
    w2 = w.reshape(I_DIM, K_CONTRACT)

    # Build Z[c, o*7+n] = x_pad[j, (o - d_l) % 7, n + k] with c = j*6 + l*3 + k
    # (3-tap zero-padded window along n; the epilogue's o-shift folded in).
    if shift == 1:
        d = (1, 2)           # o-shift for the l=0 / l=1 contributions
    else:
        d = (-2, -1)
    xp = jnp.pad(x0, ((0, 0), (0, 0), (1, 1)))               # (512, 7, 9)
    r0 = jnp.roll(xp, d[0], axis=1)
    r1 = jnp.roll(xp, d[1], axis=1)
    z = jnp.stack([r0[:, :, 0:7], r0[:, :, 1:8], r0[:, :, 2:9],
                   r1[:, :, 0:7], r1[:, :, 1:8], r1[:, :, 2:9]],
                  axis=1)                                    # (512, 6, 7, 7)
    Z = z.reshape(K_CONTRACT, M_SPATIAL)                     # (3072, 49)

    y2 = _wz_matmul(w2, Z)                                   # (512, 49) == final
    return y2.reshape(1, I_DIM, O_DIM, N_DIM)


def _reference(x, w, shift=SHIFT_DIRECTION):
    """Pure-jnp reference mirroring the torch forward pass op-for-op."""
    x4 = x.reshape(1, 3584, 7, 1)
    xp = jnp.pad(x4, ((0, 0), (0, 0), (1, 1), (0, 0)))       # (1,3584,9,1)
    cols = jnp.stack([xp[:, :, k:k + 7, 0] for k in range(3)], axis=2)  # (1,3584,3,7)
    t2 = cols.reshape(1, 512, 7, 3, 7)
    t3 = jnp.einsum('mjokn,ijlk->mioln', t2, w, precision='highest')    # (1,512,7,2,7)
    t4 = t3.reshape(1, 512, 14, 7)
    t4 = jnp.roll(t4, shift, axis=2)
    t4 = t4.reshape(1, 512, 7, 2, 7)
    t4 = jnp.sum(t4, axis=3)
    return jnp.roll(t4, shift, axis=2)


if __name__ == "__main__":
    key = jax.random.PRNGKey(0)
    kx, kw = jax.random.split(key)
    # Shapes are fixed by the module's hard-coded reshapes.
    x = jax.random.normal(kx, (1, 512, 7, 7), dtype=jnp.float32)
    w = jax.random.normal(kw, (512, 512, 2, 3), dtype=jnp.float32)  # torch.randn([512,512,2,3])

    fwd = jax.jit(kernel_generated_6_forward)
    y = jax.block_until_ready(fwd(x, w))
    assert y.shape == (1, 512, 7, 7), y.shape
    y_ref = _reference(x, w, SHIFT_DIRECTION)
    assert jnp.allclose(y, y_ref, atol=5e-2, rtol=5e-3), \
        float(jnp.max(jnp.abs(y - y_ref)))

    # Also validate the other random draw of the module's shift_direction.
    fwd_neg = jax.jit(lambda a, b: kernel_generated_6_forward(a, b, shift=-1))
    y_neg = jax.block_until_ready(fwd_neg(x, w))
    y_ref_neg = _reference(x, w, -1)
    assert jnp.allclose(y_neg, y_ref_neg, atol=5e-2, rtol=5e-3), \
        float(jnp.max(jnp.abs(y_neg - y_ref_neg)))

    print("KERNEL_OK")
</pallas_src>

<mosaic_0001>
module attributes {stable_mosaic.version = 11 : i64} {
  func.func @_wz_matmul_kernel(%arg0: i32, %arg1: memref<128x3072xf32, #tpu.memory_space<vmem>>, %arg2: memref<3072x49xf32, #tpu.memory_space<vmem>>, %arg3: memref<128x49xf32, #tpu.memory_space<vmem>>) attributes {dimension_semantics = [#tpu.dimension_semantics<parallel>], iteration_bounds = array<i64: 4>, scalar_prefetch = 0 : i64, scratch_operands = 0 : i64, tpu.core_type = #tpu.core_type<tc>, window_params = [{transform_indices = @transform_0, window_bounds = array<i64: 128, 3072>}, {pipeline_mode = #tpu.pipeline_mode<synchronous>, transform_indices = @transform_1, window_bounds = array<i64: 3072, 49>}, {transform_indices = @transform_2, window_bounds = array<i64: 128, 49>}]} {
    %c0 = arith.constant 0 : index
    %c0_0 = arith.constant 0 : index
    %0 = vector.load %arg1[%c0, %c0_0] : memref<128x3072xf32, #tpu.memory_space<vmem>>, vector<128x3072xf32>
    %c0_1 = arith.constant 0 : index
    %c0_2 = arith.constant 0 : index
    %1 = vector.load %arg2[%c0_1, %c0_2] : memref<3072x49xf32, #tpu.memory_space<vmem>>, vector<3072x49xf32>
    %cst = arith.constant dense<0.000000e+00> : vector<128x49xf32>
    %2 = tpu.matmul %0, %1, %cst {dimension_numbers = #tpu.dot_dimension_numbers<[1], [0], [0], [1], [0, 0, 1, 1], [], []>} : vector<128x3072xf32>, vector<3072x49xf32>, vector<128x49xf32> -> vector<128x49xf32>
    %c0_3 = arith.constant 0 : index
    %c0_4 = arith.constant 0 : index
    %3 = vector.load %arg3[%c0_3, %c0_4] : memref<128x49xf32, #tpu.memory_space<vmem>>, vector<128x49xf32>
    tpu.vector_store %arg3[%c0_3, %c0_4], %2 {strides = array<i32>} : memref<128x49xf32, #tpu.memory_space<vmem>>, vector<128x49xf32>,
    return
  }
  func.func @transform_0(%arg0: i32) -> (i32, i32) {
    %c0_i32 = arith.constant 0 : i32
    %c0_i32_0 = arith.constant 0 : i32
    return %arg0, %c0_i32 : i32, i32
  }
  func.func @transform_1(%arg0: i32) -> (i32, i32) {
    %c0_i32 = arith.constant 0 : i32
    %c0_i32_0 = arith.constant 0 : i32
    %c0_i32_1 = arith.constant 0 : i32
    return %c0_i32, %c0_i32_0 : i32, i32
  }
  func.func @transform_2(%arg0: i32) -> (i32, i32) {
    %c0_i32 = arith.constant 0 : i32
    %c0_i32_0 = arith.constant 0 : i32
    return %arg0, %c0_i32 : i32, i32
  }
}

</mosaic_0001>

<llo_original>
// kernel: kernel_generated_6_forward.1
$region0: #{kernel_generated_6_forward.1}
  #allocation0 [shape = 'u32[]', space=smem, size = 0x4, offset = 0x4, fixed_abs, tag = 'smem constant byte address 0x4 - core index']
  #allocation1 [shape = 'u32[144,128]{1,0:T(1,128)}', space=vmem, size = 0x12000, scoped, tag = 'internal scratch']
  %s0 = inlined_call_operand.vmem [shape: f32[512,3072], index: 0, kind: input, shape index: {}]
  %s1 = inlined_call_operand.vmem [shape: f32[3072,49], index: 1, kind: input, shape index: {}]
  %s2 = inlined_call_operand.vmem [shape: f32[512,49], index: 2, kind: output, shape index: {}]
  %s3 = sld [smem:[#allocation0]]
  $region41: #{kernel_generated_6_forward.1} parent=0
    _
  %s5 = ssub.s32 1, %s3
  %s6 = scalar_select 0, %s5, %s3
  loop: start=0, step=1, limit=6
  $region2: #{kernel_generated_6_forward.1} parent=0 // loop_pre_header
    _
  $region3: #{kernel_generated_6_forward.1} parent=0 // loop_header
    %s8 = sphi 0, %s12
    %p9 = scmp.ge.s32.totalorder %s8, 6
    %s18 = sphi 0, %s20
    %s21 = sphi 0, %s18
    %s22 = sphi 0, %s21
    %s38 = sphi 0, %s22
    %s42 = sphi 0, %s42
    %s44 = sphi 0, %s42
    %s45 = sphi 0, %s44
    %s59 = sphi 0, %s45
    %s65 = sphi 0, %s67
    %s68 = sphi 0, %s65
    %s69 = sphi 0, %s68
    %s85 = sphi 0, %s69
  $region4: #{kernel_generated_6_forward.1} parent=0 // loop_header_branch
    %11 = sbr.rel (%p9) target = $region8
  $region5: #{kernel_generated_6_forward.1} parent=0 // loop_body
    %s13 = ssub.s32 %s8, 1
    %s14 = ssub.s32 %s8, 2
    %s15 = sadd.s32 %s8, 1
    %s16 = ssub.s32 %s8, %s15
    %p17 = scmp.eq.s32.totalorder %s16, 0
    %s19 = sadd.s32 %s18, 1
    %s20 = scalar_select %p17, %s18, %s19
    %p23 = pneg %p17
    %p24 = scmp.eq.s32.totalorder %s8, 3
    %p25 = por %p23, %p24
    %p26 = scmp.ne.s32.totalorder %s18, %s21
    %p27 = scmp.eq.s32.totalorder %s8, 0
    %p28 = por %p26, %p27
    %p29 = scmp.ne.s32.totalorder %s18, %s21
    %p30 = scmp.eq.s32.totalorder %s13, 3
    %p31 = por %p29, %p30
    %p32 = scmp.ne.s32.totalorder %s21, %s22
    %p33 = scmp.eq.s32.totalorder %s13, 0
    %p34 = por %p32, %p33
    %p35 = scmp.ne.s32.totalorder %s21, %s22
    %p36 = scmp.eq.s32.totalorder %s14, 3
    %p37 = por %p35, %p36
    %p39 = scmp.ne.s32.totalorder %s22, %s38
    %p40 = scmp.eq.s32.totalorder %s14, 0
    %p41 = por %p39, %p40
    %s43 = sadd.s32 %s42, 1
    %p46 = scmp.eq.s32.totalorder %s8, 3
    %p47 = scmp.ne.s32.totalorder %s42, %s44
    %p48 = scmp.eq.s32.totalorder %s8, 0
    %p49 = por %p47, %p48
    %p50 = scmp.ne.s32.totalorder %s42, %s44
    %p51 = scmp.eq.s32.totalorder %s13, 3
    %p52 = por %p50, %p51
    %p53 = scmp.ne.s32.totalorder %s44, %s45
    %p54 = scmp.eq.s32.totalorder %s13, 0
    %p55 = por %p53, %p54
    %p56 = scmp.ne.s32.totalorder %s44, %s45
    %p57 = scmp.eq.s32.totalorder %s14, 3
    %p58 = por %p56, %p57
    %p60 = scmp.ne.s32.totalorder %s45, %s59
    %p61 = scmp.eq.s32.totalorder %s14, 0
    %p62 = por %p60, %p61
    %s63 = ssub.s32 %s8, %s15
    %p64 = scmp.eq.s32.totalorder %s63, 0
    %s66 = sadd.s32 %s65, 1
    %s67 = scalar_select %p64, %s65, %s66
    %p70 = pneg %p64
    %p71 = scmp.eq.s32.totalorder %s8, 3
    %p72 = por %p70, %p71
    %p73 = scmp.ne.s32.totalorder %s65, %s68
    %p74 = scmp.eq.s32.totalorder %s8, 0
    %p75 = por %p73, %p74
    %p76 = scmp.ne.s32.totalorder %s65, %s68
    %p77 = scmp.eq.s32.totalorder %s13, 3
    %p78 = por %p76, %p77
    %p79 = scmp.ne.s32.totalorder %s68, %s69
    %p80 = scmp.eq.s32.totalorder %s13, 0
    %p81 = por %p79, %p80
    %p82 = scmp.ne.s32.totalorder %s68, %s69
    %p83 = scmp.eq.s32.totalorder %s14, 3
    %p84 = por %p82, %p83
    %p86 = scmp.ne.s32.totalorder %s69, %s85
    %p87 = scmp.eq.s32.totalorder %s14, 0
    %p88 = por %p86, %p87
    %p89 = scmp.le.s32.totalorder 1, %s8
    %p90 = scmp.lt.s32.totalorder %s8, 5
    %p91 = pnand %p89, %p90
    %p92 = pneg %p91
    // Predicated region
    $region9: #{kernel_generated_6_forward.1} parent=5 // pred_check
      _
    $region10: #{kernel_generated_6_forward.1} parent=5 // pred_check_branch
      %94 = sbr.rel (%p91) target = $region12
    $region11: #{kernel_generated_6_forward.1} parent=5 // pred_region
      %s95 = ssub.s32 %s8, 1
      // Predicated region
      $region13: #{kernel_generated_6_forward.1} parent=11 // pred_check
        %p96 = pneg %p55
      $region14: #{kernel_generated_6_forward.1} parent=11 // pred_check_branch
        %98 = sbr.rel (%p96) target = $region16
      $region15: #{kernel_generated_6_forward.1} parent=11 // pred_region
        _
      $region16: #{kernel_generated_6_forward.1} parent=11 // pred_fallthru
        _
    $region12: #{kernel_generated_6_forward.1} parent=5 // pred_fallthru
      _
    %p99 = scmp.lt.s32.totalorder %s8, 4
    // Predicated region
    $region17: #{kernel_generated_6_forward.1} parent=5 // pred_check
      %p100 = pneg %p99
    $region18: #{kernel_generated_6_forward.1} parent=5 // pred_check_branch
      %102 = sbr.rel (%p100) target = $region20
    $region19: #{kernel_generated_6_forward.1} parent=5 // pred_region
      // Predicated region
      $region21: #{kernel_generated_6_forward.1} parent=19 // pred_check
        %p103 = pneg %p28
      $region22: #{kernel_generated_6_forward.1} parent=19 // pred_check_branch
        %105 = sbr.rel (%p103) target = $region24
      $region23: #{kernel_generated_6_forward.1} parent=19 // pred_region
        %s106 = smul.u32 16, %s8
        %p107 = scmp.lt.s32.totalorder %s106, 63
        %s108 = scalar_select %p107, %s106, 63
        %s109 = smul.addr %s108, 24
        %s110 = smul.addr %s109, 8
        %s111 = scalar_lea.vmem %s0, %s110
        %s112 = smul.u32 16, %s8
      $region24: #{kernel_generated_6_forward.1} parent=19 // pred_fallthru
        _
    $region20: #{kernel_generated_6_forward.1} parent=5 // pred_fallthru
      _
    %p113 = scmp.le.s32.totalorder 1, %s8
    %p114 = scmp.lt.s32.totalorder %s8, 5
    %p115 = pnand %p113, %p114
    %p116 = pneg %p115
    // Predicated region
    $region25: #{kernel_generated_6_forward.1} parent=5 // pred_check
      _
    $region26: #{kernel_generated_6_forward.1} parent=5 // pred_check_branch
      %118 = sbr.rel (%p115) target = $region28
    $region27: #{kernel_generated_6_forward.1} parent=5 // pred_region
      %s119 = ssub.s32 %s8, 1
      %s120 = smul.u32 16, %s13
      %p121 = scmp.lt.s32.totalorder %s120, 63
      %s122 = scalar_select %p121, %s120, 63
      %s123 = smul.addr %s122, 24
      %s124 = smul.addr %s123, 8
      %s125 = scalar_lea.vmem %s0, %s124
      %p126 = pneg %p34
      %p127 = pneg %p31
      %p128 = pneg %p55
      %p129 = pneg %p52
      %p130 = pneg %p81
      %p131 = pneg %p78
      %s132 = smul.u32 16, %s13
      %p133 = scmp.lt.s32.totalorder %s132, 63
      %s134 = scalar_select %p133, %s132, 63
      %s135 = smul.addr %s134, 8
      %s136 = scalar_lea.vmem %s2, %s135
      %s137 = smul.u32 16, %s13
      %p138 = scmp.lt.s32.totalorder %s137, 63
      %s139 = scalar_select %p138, %s137, 63
      %s140 = smul.addr %s139, 24
      %s141 = smul.addr %s140, 8
      %s142 = scalar_lea.vmem %s0, %s141
      %s143 = smul.u32 16, %s13
      %s144 = smul.u32 16, %s13
      %p145 = scmp.lt.s32.totalorder %s144, 63
      %s146 = scalar_select %p145, %s144, 63
      %s147 = smul.addr %s146, 8
      %s148 = scalar_lea.vmem %s2, %s147
      %s149 = smul.u32 16, %s13
      %v150 = vld [vmem:[%s142] sm:$0xff]
      %v151 = vld [vmem:[%s142 + $0x8] sm:$0xff]
      %v152 = vld [vmem:[%s142 + $0x10] sm:$0xff]
      %v153 = vld [vmem:[%s142 + $0x18] sm:$0xff]
      %v154 = vld [vmem:[%s142 + $0x20] sm:$0xff]
      %v155 = vld [vmem:[%s142 + $0x28] sm:$0xff]
      %v156 = vld [vmem:[%s142 + $0x30] sm:$0xff]
      %v157 = vld [vmem:[%s142 + $0x38] sm:$0xff]
      %v158 = vld [vmem:[%s142 + $0x40] sm:$0xff]
      %v159 = vld [vmem:[%s142 + $0x48] sm:$0xff]
      %v160 = vld [vmem:[%s142 + $0x50] sm:$0xff]
      %v161 = vld [vmem:[%s142 + $0x58] sm:$0xff]
      %v162 = vld [vmem:[%s142 + $0x60] sm:$0xff]
      %v163 = vld [vmem:[%s142 + $0x68] sm:$0xff]
      %v164 = vld [vmem:[%s142 + $0x70] sm:$0xff]
      %v165 = vld [vmem:[%s142 + $0x78] sm:$0xff]
      %v166 = vld [vmem:[%s142 + $0x80] sm:$0xff]
      %v167 = vld [vmem:[%s142 + $0x88] sm:$0xff]
      %v168 = vld [vmem:[%s142 + $0x90] sm:$0xff]
      %v169 = vld [vmem:[%s142 + $0x98] sm:$0xff]
      %v170 = vld [vmem:[%s142 + $0xa0] sm:$0xff]
      %v171 = vld [vmem:[%s142 + $0xa8] sm:$0xff]
      %v172 = vld [vmem:[%s142 + $0xb0] sm:$0xff]
      %v173 = vld [vmem:[%s142 + $0xb8] sm:$0xff]
      %v174 = vld [vmem:[%s142 + $0xc0] sm:$0xff]
      %v175 = vld [vmem:[%s142 + $0xc8] sm:$0xff]
      %v176 = vld [vmem:[%s142 + $0xd0] sm:$0xff]
      %v177 = vld [vmem:[%s142 + $0xd8] sm:$0xff]
      %v178 = vld [vmem:[%s142 + $0xe0] sm:$0xff]
      %v179 = vld [vmem:[%s142 + $0xe8] sm:$0xff]
      %v180 = vld [vmem:[%s142 + $0xf0] sm:$0xff]
      %v181 = vld [vmem:[%s142 + $0xf8] sm:$0xff]
      %v182 = vld [vmem:[%s142 + $0x100] sm:$0xff]
      %v183 = vld [vmem:[%s142 + $0x108] sm:$0xff]
      %v184 = vld [vmem:[%s142 + $0x110] sm:$0xff]
      %v185 = vld [vmem:[%s142 + $0x118] sm:$0xff]
      %v186 = vld [vmem:[%s142 + $0x120] sm:$0xff]
      %v187 = vld [vmem:[%s142 + $0x128] sm:$0xff]
      %v188 = vld [vmem:[%s142 + $0x130] sm:$0xff]
      %v189 = vld [vmem:[%s142 + $0x138] sm:$0xff]
      %v190 = vld [vmem:[%s142 + $0x140] sm:$0xff]
      %v191 = vld [vmem:[%s142 + $0x148] sm:$0xff]
      %v192 = vld [vmem:[%s142 + $0x150] sm:$0xff]
      %v193 = vld [vmem:[%s142 + $0x158] sm:$0xff]
      %v194 = vld [vmem:[%s142 + $0x160] sm:$0xff]
      %v195 = vld [vmem:[%s142 + $0x168] sm:$0xff]
      %v196 = vld [vmem:[%s142 + $0x170] sm:$0xff]
      %v197 = vld [vmem:[%s142 + $0x178] sm:$0xff]
      %v198 = vld [vmem:[%s142 + $0x180] sm:$0xff]
      %v199 = vld [vmem:[%s142 + $0x188] sm:$0xff]
      %v200 = vld [vmem:[%s142 + $0x190] sm:$0xff]
      %v201 = vld [vmem:[%s142 + $0x198] sm:$0xff]
      %v202 = vld [vmem:[%s142 + $0x1a0] sm:$0xff]
      %v203 = vld [vmem:[%s142 + $0x1a8] sm:$0xff]
      %v204 = vld [vmem:[%s142 + $0x1b0] sm:$0xff]
      %v205 = vld [vmem:[%s142 + $0x1b8] sm:$0xff]
      %v206 = vld [vmem:[%s142 + $0x1c0] sm:$0xff]
      %v207 = vld [vmem:[%s142 + $0x1c8] sm:$0xff]
      %v208 = vld [vmem:[%s142 + $0x1d0] sm:$0xff]
      %v209 = vld [vmem:[%s142 + $0x1d8] sm:$0xff]
      %v210 = vld [vmem:[%s142 + $0x1e0] sm:$0xff]
      %v211 = vld [vmem:[%s142 + $0x1e8] sm:$0xff]
      %v212 = vld [vmem:[%s142 + $0x1f0] sm:$0xff]
      %v213 = vld [vmem:[%s142 + $0x1f8] sm:$0xff]
      %v214 = vld [vmem:[%s142 + $0x200] sm:$0xff]
      %v215 = vld [vmem:[%s142 + $0x208] sm:$0xff]
      %v216 = vld [vmem:[%s142 + $0x210] sm:$0xff]
      %v217 = vld [vmem:[%s142 + $0x218] sm:$0xff]
      %v218 = vld [vmem:[%s142 + $0x220] sm:$0xff]
      %v219 = vld [vmem:[%s142 + $0x228] sm:$0xff]
      %v220 = vld [vmem:[%s142 + $0x230] sm:$0xff]
      %v221 = vld [vmem:[%s142 + $0x238] sm:$0xff]
      %v222 = vld [vmem:[%s142 + $0x240] sm:$0xff]
      %v223 = vld [vmem:[%s142 + $0x248] sm:$0xff]
      %v224 = vld [vmem:[%s142 + $0x250] sm:$0xff]
      %v225 = vld [vmem:[%s142 + $0x258] sm:$0xff]
      %v226 = vld [vmem:[%s142 + $0x260] sm:$0xff]
      %v227 = vld [vmem:[%s142 + $0x268] sm:$0xff]
      %v228 = vld [vmem:[%s142 + $0x270] sm:$0xff]
      %v229 = vld [vmem:[%s142 + $0x278] sm:$0xff]
      %v230 = vld [vmem:[%s142 + $0x280] sm:$0xff]
      %v231 = vld [vmem:[%s142 + $0x288] sm:$0xff]
      %v232 = vld [vmem:[%s142 + $0x290] sm:$0xff]
      %v233 = vld [vmem:[%s142 + $0x298] sm:$0xff]
      %v234 = vld [vmem:[%s142 + $0x2a0] sm:$0xff]
      %v235 = vld [vmem:[%s142 + $0x2a8] sm:$0xff]
      %v236 = vld [vmem:[%s142 + $0x2b0] sm:$0xff]
      %v237 = vld [vmem:[%s142 + $0x2b8] sm:$0xff]
      %v238 = vld [vmem:[%s142 + $0x2c0] sm:$0xff]
      %v239 = vld [vmem:[%s142 + $0x2c8] sm:$0xff]
      %v240 = vld [vmem:[%s142 + $0x2d0] sm:$0xff]
      %v241 = vld [vmem:[%s142 + $0x2d8] sm:$0xff]
      %v242 = vld [vmem:[%s142 + $0x2e0] sm:$0xff]
      %v243 = vld [vmem:[%s142 + $0x2e8] sm:$0xff]
      %v244 = vld [vmem:[%s142 + $0x2f0] sm:$0xff]
      %v245 = vld [vmem:[%s142 + $0x2f8] sm:$0xff]
      %v246 = vld [vmem:[%s142 + $0x300] sm:$0xff]
      %v247 = vld [vmem:[%s142 + $0x308] sm:$0xff]
      %v248 = vld [vmem:[%s142 + $0x310] sm:$0xff]
      %v249 = vld [vmem:[%s142 + $0x318] sm:$0xff]
      %v250 = vld [vmem:[%s142 + $0x320] sm:$0xff]
      %v251 = vld [vmem:[%s142 + $0x328] sm:$0xff]
      %v252 = vld [vmem:[%s142 + $0x330] sm:$0xff]
      %v253 = vld [vmem:[%s142 + $0x338] sm:$0xff]
      %v254 = vld [vmem:[%s142 + $0x340] sm:$0xff]
      %v255 = vld [vmem:[%s142 + $0x348] sm:$0xff]
      %v256 = vld [vmem:[%s142 + $0x350] sm:$0xff]
      %v257 = vld [vmem:[%s142 + $0x358] sm:$0xff]
      %v258 = vld [vmem:[%s142 + $0x360] sm:$0xff]
      %v259 = vld [vmem:[%s142 + $0x368] sm:$0xff]
      %v260 = vld [vmem:[%s142 + $0x370] sm:$0xff]
      %v261 = vld [vmem:[%s142 + $0x378] sm:$0xff]
      %v262 = vld [vmem:[%s142 + $0x380] sm:$0xff]
      %v263 = vld [vmem:[%s142 + $0x388] sm:$0xff]
      %v264 = vld [vmem:[%s142 + $0x390] sm:$0xff]
      %v265 = vld [vmem:[%s142 + $0x398] sm:$0xff]
      %v266 = vld [vmem:[%s142 + $0x3a0] sm:$0xff]
      %v267 = vld [vmem:[%s142 + $0x3a8] sm:$0xff]
      %v268 = vld [vmem:[%s142 + $0x3b0] sm:$0xff]
      %v269 = vld [vmem:[%s142 + $0x3b8] sm:$0xff]
      %v270 = vld [vmem:[%s142 + $0x3c0] sm:$0xff]
      %v271 = vld [vmem:[%s142 + $0x3c8] sm:$0xff]
      %v272 = vld [vmem:[%s142 + $0x3d0] sm:$0xff]
      %v273 = vld [vmem:[%s142 + $0x3d8] sm:$0xff]
      %v274 = vld [vmem:[%s142 + $0x3e0] sm:$0xff]
      %v275 = vld [vmem:[%s142 + $0x3e8] sm:$0xff]
      %v276 = vld [vmem:[%s142 + $0x3f0] sm:$0xff]
      %v277 = vld [vmem:[%s142 + $0x3f8] sm:$0xff]
      %v278 = vld [vmem:[%s142 + $0x400] sm:$0xff]
      %v279 = vld [vmem:[%s142 + $0x408] sm:$0xff]
      %v280 = vld [vmem:[%s142 + $0x410] sm:$0xff]
      %v281 = vld [vmem:[%s142 + $0x418] sm:$0xff]
      %v282 = vld [vmem:[%s142 + $0x420] sm:$0xff]
      %v283 = vld [vmem:[%s142 + $0x428] sm:$0xff]
      %v284 = vld [vmem:[%s142 + $0x430] sm:$0xff]
      %v285 = vld [vmem:[%s142 + $0x438] sm:$0xff]
      %v286 = vld [vmem:[%s142 + $0x440] sm:$0xff]
      %v287 = vld [vmem:[%s142 + $0x448] sm:$0xff]
      %v288 = vld [vmem:[%s142 + $0x450] sm:$0xff]
      %v289 = vld [vmem:[%s142 + $0x458] sm:$0xff]
      %v290 = vld [vmem:[%s142 + $0x460] sm:$0xff]
      %v291 = vld [vmem:[%s142 + $0x468] sm:$0xff]
      %v292 = vld [vmem:[%s142 + $0x470] sm:$0xff]
      %v293 = vld [vmem:[%s142 + $0x478] sm:$0xff]
      %v294 = vld [vmem:[%s142 + $0x480] sm:$0xff]
      %v295 = vld [vmem:[%s142 + $0x488] sm:$0xff]
      %v296 = vld [vmem:[%s142 + $0x490] sm:$0xff]
      %v297 = vld [vmem:[%s142 + $0x498] sm:$0xff]
      %v298 = vld [vmem:[%s142 + $0x4a0] sm:$0xff]
      %v299 = vld [vmem:[%s142 + $0x4a8] sm:$0xff]
      %v300 = vld [vmem:[%s142 + $0x4b0] sm:$0xff]
      %v301 = vld [vmem:[%s142 + $0x4b8] sm:$0xff]
      %v302 = vld [vmem:[%s142 + $0x4c0] sm:$0xff]
      %v303 = vld [vmem:[%s142 + $0x4c8] sm:$0xff]
      %v304 = vld [vmem:[%s142 + $0x4d0] sm:$0xff]
      %v305 = vld [vmem:[%s142 + $0x4d8] sm:$0xff]
      %v306 = vld [vmem:[%s142 + $0x4e0] sm:$0xff]
      %v307 = vld [vmem:[%s142 + $0x4e8] sm:$0xff]
      %v308 = vld [vmem:[%s142 + $0x4f0] sm:$0xff]
      %v309 = vld [vmem:[%s142 + $0x4f8] sm:$0xff]
      %v310 = vld [vmem:[%s142 + $0x500] sm:$0xff]
      %v311 = vld [vmem:[%s142 + $0x508] sm:$0xff]
      %v312 = vld [vmem:[%s142 + $0x510] sm:$0xff]
      %v313 = vld [vmem:[%s142 + $0x518] sm:$0xff]
      %v314 = vld [vmem:[%s142 + $0x520] sm:$0xff]
      %v315 = vld [vmem:[%s142 + $0x528] sm:$0xff]
      %v316 = vld [vmem:[%s142 + $0x530] sm:$0xff]
      %v317 = vld [vmem:[%s142 + $0x538] sm:$0xff]
      %v318 = vld [vmem:[%s142 + $0x540] sm:$0xff]
      %v319 = vld [vmem:[%s142 + $0x548] sm:$0xff]
      %v320 = vld [vmem:[%s142 + $0x550] sm:$0xff]
      %v321 = vld [vmem:[%s142 + $0x558] sm:$0xff]
      %v322 = vld [vmem:[%s142 + $0x560] sm:$0xff]
      %v323 = vld [vmem:[%s142 + $0x568] sm:$0xff]
      %v324 = vld [vmem:[%s142 + $0x570] sm:$0xff]
      %v325 = vld [vmem:[%s142 + $0x578] sm:$0xff]
      %v326 = vld [vmem:[%s142 + $0x580] sm:$0xff]
      %v327 = vld [vmem:[%s142 + $0x588] sm:$0xff]
      %v328 = vld [vmem:[%s142 + $0x590] sm:$0xff]
      %v329 = vld [vmem:[%s142 + $0x598] sm:$0xff]
      %v330 = vld [vmem:[%s142 + $0x5a0] sm:$0xff]
      %v331 = vld [vmem:[%s142 + $0x5a8] sm:$0xff]
      %v332 = vld [vmem:[%s142 + $0x5b0] sm:$0xff]
      %v333 = vld [vmem:[%s142 + $0x5b8] sm:$0xff]
      %v334 = vld [vmem:[%s142 + $0x5c0] sm:$0xff]
      %v335 = vld [vmem:[%s142 + $0x5c8] sm:$0xff]
      %v336 = vld [vmem:[%s142 + $0x5d0] sm:$0xff]
      %v337 = vld [vmem:[%s142 + $0x5d8] sm:$0xff]
      %v338 = vld [vmem:[%s142 + $0x5e0] sm:$0xff]
      %v339 = vld [vmem:[%s142 + $0x5e8] sm:$0xff]
      %v340 = vld [vmem:[%s142 + $0x5f0] sm:$0xff]
      %v341 = vld [vmem:[%s142 + $0x5f8] sm:$0xff]
      %v342 = vld [vmem:[%s142 + $0x600] sm:$0xff]
      %v343 = vld [vmem:[%s142 + $0x608] sm:$0xff]
      %v344 = vld [vmem:[%s142 + $0x610] sm:$0xff]
      %v345 = vld [vmem:[%s142 + $0x618] sm:$0xff]
      %v346 = vld [vmem:[%s142 + $0x620] sm:$0xff]
      %v347 = vld [vmem:[%s142 + $0x628] sm:$0xff]
      %v348 = vld [vmem:[%s142 + $0x630] sm:$0xff]
      %v349 = vld [vmem:[%s142 + $0x638] sm:$0xff]
      %v350 = vld [vmem:[%s142 + $0x640] sm:$0xff]
      %v351 = vld [vmem:[%s142 + $0x648] sm:$0xff]
      %v352 = vld [vmem:[%s142 + $0x650] sm:$0xff]
      %v353 = vld [vmem:[%s142 + $0x658] sm:$0xff]
      %v354 = vld [vmem:[%s142 + $0x660] sm:$0xff]
      %v355 = vld [vmem:[%s142 + $0x668] sm:$0xff]
      %v356 = vld [vmem:[%s142 + $0x670] sm:$0xff]
      %v357 = vld [vmem:[%s142 + $0x678] sm:$0xff]
      %v358 = vld [vmem:[%s142 + $0x680] sm:$0xff]
      %v359 = vld [vmem:[%s142 + $0x688] sm:$0xff]
      %v360 = vld [vmem:[%s142 + $0x690] sm:$0xff]
      %v361 = vld [vmem:[%s142 + $0x698] sm:$0xff]
      %v362 = vld [vmem:[%s142 + $0x6a0] sm:$0xff]
      %v363 = vld [vmem:[%s142 + $0x6a8] sm:$0xff]
      %v364 = vld [vmem:[%s142 + $0x6b0] sm:$0xff]
      %v365 = vld [vmem:[%s142 + $0x6b8] sm:$0xff]
      %v366 = vld [vmem:[%s142 + $0x6c0] sm:$0xff]
      %v367 = vld [vmem:[%s142 + $0x6c8] sm:$0xff]
      %v368 = vld [vmem:[%s142 + $0x6d0] sm:$0xff]
      %v369 = vld [vmem:[%s142 + $0x6d8] sm:$0xff]
      %v370 = vld [vmem:[%s142 + $0x6e0] sm:$0xff]
      %v371 = vld [vmem:[%s142 + $0x6e8] sm:$0xff]
      %v372 = vld [vmem:[%s142 + $0x6f0] sm:$0xff]
      %v373 = vld [vmem:[%s142 + $0x6f8] sm:$0xff]
      %v374 = vld [vmem:[%s142 + $0x700] sm:$0xff]
      %v375 = vld [vmem:[%s142 + $0x708] sm:$0xff]
      %v376 = vld [vmem:[%s142 + $0x710] sm:$0xff]
      %v377 = vld [vmem:[%s142 + $0x718] sm:$0xff]
      %v378 = vld [vmem:[%s142 + $0x720] sm:$0xff]
      %v379 = vld [vmem:[%s142 + $0x728] sm:$0xff]
      %v380 = vld [vmem:[%s142 + $0x730] sm:$0xff]
      %v381 = vld [vmem:[%s142 + $0x738] sm:$0xff]
      %v382 = vld [vmem:[%s142 + $0x740] sm:$0xff]
      %v383 = vld [vmem:[%s142 + $0x748] sm:$0xff]
      %v384 = vld [vmem:[%s142 + $0x750] sm:$0xff]
      %v385 = vld [vmem:[%s142 + $0x758] sm:$0xff]
      %v386 = vld [vmem:[%s142 + $0x760] sm:$0xff]
      %v387 = vld [vmem:[%s142 + $0x768] sm:$0xff]
      %v388 = vld [vmem:[%s142 + $0x770] sm:$0xff]
      %v389 = vld [vmem:[%s142 + $0x778] sm:$0xff]
      %v390 = vld [vmem:[%s142 + $0x780] sm:$0xff]
      %v391 = vld [vmem:[%s142 + $0x788] sm:$0xff]
      %v392 = vld [vmem:[%s142 + $0x790] sm:$0xff]
      %v393 = vld [vmem:[%s142 + $0x798] sm:$0xff]
      %v394 = vld [vmem:[%s142 + $0x7a0] sm:$0xff]
      %v395 = vld [vmem:[%s142 + $0x7a8] sm:$0xff]
      %v396 = vld [vmem:[%s142 + $0x7b0] sm:$0xff]
      %v397 = vld [vmem:[%s142 + $0x7b8] sm:$0xff]
      %v398 = vld [vmem:[%s142 + $0x7c0] sm:$0xff]
      %v399 = vld [vmem:[%s142 + $0x7c8] sm:$0xff]
      %v400 = vld [vmem:[%s142 + $0x7d0] sm:$0xff]
      %v401 = vld [vmem:[%s142 + $0x7d8] sm:$0xff]
      %v402 = vld [vmem:[%s142 + $0x7e0] sm:$0xff]
      %v403 = vld [vmem:[%s142 + $0x7e8] sm:$0xff]
      %v404 = vld [vmem:[%s142 + $0x7f0] sm:$0xff]
      %v405 = vld [vmem:[%s142 + $0x7f8] sm:$0xff]
      %v406 = vld [vmem:[%s142 + $0x800] sm:$0xff]
      %v407 = vld [vmem:[%s142 + $0x808] sm:$0xff]
      %v408 = vld [vmem:[%s142 + $0x810] sm:$0xff]
      %v409 = vld [vmem:[%s142 + $0x818] sm:$0xff]
      %v410 = vld [vmem:[%s142 + $0x820] sm:$0xff]
      %v411 = vld [vmem:[%s142 + $0x828] sm:$0xff]
      %v412 = vld [vmem:[%s142 + $0x830] sm:$0xff]
      %v413 = vld [vmem:[%s142 + $0x838] sm:$0xff]
      %v414 = vld [vmem:[%s142 + $0x840] sm:$0xff]
      %v415 = vld [vmem:[%s142 + $0x848] sm:$0xff]
      %v416 = vld [vmem:[%s142 + $0x850] sm:$0xff]
      %v417 = vld [vmem:[%s142 + $0x858] sm:$0xff]
      %v418 = vld [vmem:[%s142 + $0x860] sm:$0xff]
      %v419 = vld [vmem:[%s142 + $0x868] sm:$0xff]
      %v420 = vld [vmem:[%s142 + $0x870] sm:$0xff]
      %v421 = vld [vmem:[%s142 + $0x878] sm:$0xff]
      %v422 = vld [vmem:[%s142 + $0x880] sm:$0xff]
      %v423 = vld [vmem:[%s142 + $0x888] sm:$0xff]
      %v424 = vld [vmem:[%s142 + $0x890] sm:$0xff]
      %v425 = vld [vmem:[%s142 + $0x898] sm:$0xff]
      %v426 = vld [vmem:[%s142 + $0x8a0] sm:$0xff]
      %v427 = vld [vmem:[%s142 + $0x8a8] sm:$0xff]
      %v428 = vld [vmem:[%s142 + $0x8b0] sm:$0xff]
      %v429 = vld [vmem:[%s142 + $0x8b8] sm:$0xff]
      %v430 = vld [vmem:[%s142 + $0x8c0] sm:$0xff]
      %v431 = vld [vmem:[%s142 + $0x8c8] sm:$0xff]
      %v432 = vld [vmem:[%s142 + $0x8d0] sm:$0xff]
      %v433 = vld [vmem:[%s142 + $0x8d8] sm:$0xff]
      %v434 = vld [vmem:[%s142 + $0x8e0] sm:$0xff]
      %v435 = vld [vmem:[%s142 + $0x8e8] sm:$0xff]
      %v436 = vld [vmem:[%s142 + $0x8f0] sm:$0xff]
      %v437 = vld [vmem:[%s142 + $0x8f8] sm:$0xff]
      %v438 = vld [vmem:[%s142 + $0x900] sm:$0xff]
      %v439 = vld [vmem:[%s142 + $0x908] sm:$0xff]
      %v440 = vld [vmem:[%s142 + $0x910] sm:$0xff]
      %v441 = vld [vmem:[%s142 + $0x918] sm:$0xff]
      %v442 = vld [vmem:[%s142 + $0x920] sm:$0xff]
      %v443 = vld [vmem:[%s142 + $0x928] sm:$0xff]
      %v444 = vld [vmem:[%s142 + $0x930] sm:$0xff]
      %v445 = vld [vmem:[%s142 + $0x938] sm:$0xff]
      %v446 = vld [vmem:[%s142 + $0x940] sm:$0xff]
      %v447 = vld [vmem:[%s142 + $0x948] sm:$0xff]
      %v448 = vld [vmem:[%s142 + $0x950] sm:$0xff]
      %v449 = vld [vmem:[%s142 + $0x958] sm:$0xff]
      %v450 = vld [vmem:[%s142 + $0x960] sm:$0xff]
      %v451 = vld [vmem:[%s142 + $0x968] sm:$0xff]
      %v452 = vld [vmem:[%s142 + $0x970] sm:$0xff]
      %v453 = vld [vmem:[%s142 + $0x978] sm:$0xff]
      %v454 = vld [vmem:[%s142 + $0x980] sm:$0xff]
      %v455 = vld [vmem:[%s142 + $0x988] sm:$0xff]
      %v456 = vld [vmem:[%s142 + $0x990] sm:$0xff]
      %v457 = vld [vmem:[%s142 + $0x998] sm:$0xff]
      %v458 = vld [vmem:[%s142 + $0x9a0] sm:$0xff]
      %v459 = vld [vmem:[%s142 + $0x9a8] sm:$0xff]
      %v460 = vld [vmem:[%s142 + $0x9b0] sm:$0xff]
      %v461 = vld [vmem:[%s142 + $0x9b8] sm:$0xff]
      %v462 = vld [vmem:[%s142 + $0x9c0] sm:$0xff]
      %v463 = vld [vmem:[%s142 + $0x9c8] sm:$0xff]
      %v464 = vld [vmem:[%s142 + $0x9d0] sm:$0xff]
      %v465 = vld [vmem:[%s142 + $0x9d8] sm:$0xff]
      %v466 = vld [vmem:[%s142 + $0x9e0] sm:$0xff]
      %v467 = vld [vmem:[%s142 + $0x9e8] sm:$0xff]
      %v468 = vld [vmem:[%s142 + $0x9f0] sm:$0xff]
      %v469 = vld [vmem:[%s142 + $0x9f8] sm:$0xff]
      %v470 = vld [vmem:[%s142 + $0xa00] sm:$0xff]
      %v471 = vld [vmem:[%s142 + $0xa08] sm:$0xff]
      %v472 = vld [vmem:[%s142 + $0xa10] sm:$0xff]
      %v473 = vld [vmem:[%s142 + $0xa18] sm:$0xff]
      %v474 = vld [vmem:[%s142 + $0xa20] sm:$0xff]
      %v475 = vld [vmem:[%s142 + $0xa28] sm:$0xff]
      %v476 = vld [vmem:[%s142 + $0xa30] sm:$0xff]
      %v477 = vld [vmem:[%s142 + $0xa38] sm:$0xff]
      %v478 = vld [vmem:[%s142 + $0xa40] sm:$0xff]
      %v479 = vld [vmem:[%s142 + $0xa48] sm:$0xff]
      %v480 = vld [vmem:[%s142 + $0xa50] sm:$0xff]
      %v481 = vld [vmem:[%s142 + $0xa58] sm:$0xff]
      %v482 = vld [vmem:[%s142 + $0xa60] sm:$0xff]
      %v483 = vld [vmem:[%s142 + $0xa68] sm:$0xff]
      %v484 = vld [vmem:[%s142 + $0xa70] sm:$0xff]
      %v485 = vld [vmem:[%s142 + $0xa78] sm:$0xff]
      %v486 = vld [vmem:[%s142 + $0xa80] sm:$0xff]
      %v487 = vld [vmem:[%s142 + $0xa88] sm:$0xff]
      %v488 = vld [vmem:[%s142 + $0xa90] sm:$0xff]
      %v489 = vld [vmem:[%s142 + $0xa98] sm:$0xff]
      %v490 = vld [vmem:[%s142 + $0xaa0] sm:$0xff]
      %v491 = vld [vmem:[%s142 + $0xaa8] sm:$0xff]
      %v492 = vld [vmem:[%s142 + $0xab0] sm:$0xff]
      %v493 = vld [vmem:[%s142 + $0xab8] sm:$0xff]
      %v494 = vld [vmem:[%s142 + $0xac0] sm:$0xff]
      %v495 = vld [vmem:[%s142 + $0xac8] sm:$0xff]
      %v496 = vld [vmem:[%s142 + $0xad0] sm:$0xff]
      %v497 = vld [vmem:[%s142 + $0xad8] sm:$0xff]
      %v498 = vld [vmem:[%s142 + $0xae0] sm:$0xff]
      %v499 = vld [vmem:[%s142 + $0xae8] sm:$0xff]
      %v500 = vld [vmem:[%s142 + $0xaf0] sm:$0xff]
      %v501 = vld [vmem:[%s142 + $0xaf8] sm:$0xff]
      %v502 = vld [vmem:[%s142 + $0xb00] sm:$0xff]
      %v503 = vld [vmem:[%s142 + $0xb08] sm:$0xff]
      %v504 = vld [vmem:[%s142 + $0xb10] sm:$0xff]
      %v505 = vld [vmem:[%s142 + $0xb18] sm:$0xff]
      %v506 = vld [vmem:[%s142 + $0xb20] sm:$0xff]
      %v507 = vld [vmem:[%s142 + $0xb28] sm:$0xff]
      %v508 = vld [vmem:[%s142 + $0xb30] sm:$0xff]
      %v509 = vld [vmem:[%s142 + $0xb38] sm:$0xff]
      %v510 = vld [vmem:[%s142 + $0xb40] sm:$0xff]
      %v511 = vld [vmem:[%s142 + $0xb48] sm:$0xff]
      %v512 = vld [vmem:[%s142 + $0xb50] sm:$0xff]
      %v513 = vld [vmem:[%s142 + $0xb58] sm:$0xff]
      %v514 = vld [vmem:[%s142 + $0xb60] sm:$0xff]
      %v515 = vld [vmem:[%s142 + $0xb68] sm:$0xff]
      %v516 = vld [vmem:[%s142 + $0xb70] sm:$0xff]
      %v517 = vld [vmem:[%s142 + $0xb78] sm:$0xff]
      %v518 = vld [vmem:[%s142 + $0xb80] sm:$0xff]
      %v519 = vld [vmem:[%s142 + $0xb88] sm:$0xff]
      %v520 = vld [vmem:[%s142 + $0xb90] sm:$0xff]
      %v521 = vld [vmem:[%s142 + $0xb98] sm:$0xff]
      %v522 = vld [vmem:[%s142 + $0xba0] sm:$0xff]
      %v523 = vld [vmem:[%s142 + $0xba8] sm:$0xff]
      %v524 = vld [vmem:[%s142 + $0xbb0] sm:$0xff]
      %v525 = vld [vmem:[%s142 + $0xbb8] sm:$0xff]
      %v526 = vld [vmem:[%s142 + $0xbc0] sm:$0xff]
      %v527 = vld [vmem:[%s142 + $0xbc8] sm:$0xff]
      %v528 = vld [vmem:[%s142 + $0xbd0] sm:$0xff]
      %v529 = vld [vmem:[%s142 + $0xbd8] sm:$0xff]
      %v530 = vld [vmem:[%s142 + $0xbe0] sm:$0xff]
      %v531 = vld [vmem:[%s142 + $0xbe8] sm:$0xff]
      %v532 = vld [vmem:[%s142 + $0xbf0] sm:$0xff]
      %v533 = vld [vmem:[%s142 + $0xbf8] sm:$0xff]
      %v534 = vld [vmem:[%s1] sm:$0xff]
      %v535 = vld [vmem:[%s1 + $0x8] sm:$0xff]
      %v536 = vld [vmem:[%s1 + $0x10] sm:$0xff]
      %v537 = vld [vmem:[%s1 + $0x18] sm:$0xff]
      %v538 = vld [vmem:[%s1 + $0x20] sm:$0xff]
      %v539 = vld [vmem:[%s1 + $0x28] sm:$0xff]
      %v540 = vld [vmem:[%s1 + $0x30] sm:$0xff]
      %v541 = vld [vmem:[%s1 + $0x38] sm:$0xff]
      %v542 = vld [vmem:[%s1 + $0x40] sm:$0xff]
      %v543 = vld [vmem:[%s1 + $0x48] sm:$0xff]
      %v544 = vld [vmem:[%s1 + $0x50] sm:$0xff]
      %v545 = vld [vmem:[%s1 + $0x58] sm:$0xff]
      %v546 = vld [vmem:[%s1 + $0x60] sm:$0xff]
      %v547 = vld [vmem:[%s1 + $0x68] sm:$0xff]
      %v548 = vld [vmem:[%s1 + $0x70] sm:$0xff]
      %v549 = vld [vmem:[%s1 + $0x78] sm:$0xff]
      %v550 = vld [vmem:[%s1 + $0x80] sm:$0xff]
      %v551 = vld [vmem:[%s1 + $0x88] sm:$0xff]
      %v552 = vld [vmem:[%s1 + $0x90] sm:$0xff]
      %v553 = vld [vmem:[%s1 + $0x98] sm:$0xff]
      %v554 = vld [vmem:[%s1 + $0xa0] sm:$0xff]
      %v555 = vld [vmem:[%s1 + $0xa8] sm:$0xff]
      %v556 = vld [vmem:[%s1 + $0xb0] sm:$0xff]
      %v557 = vld [vmem:[%s1 + $0xb8] sm:$0xff]
      %v558 = vld [vmem:[%s1 + $0xc0] sm:$0xff]
      %v559 = vld [vmem:[%s1 + $0xc8] sm:$0xff]
      %v560 = vld [vmem:[%s1 + $0xd0] sm:$0xff]
      %v561 = vld [vmem:[%s1 + $0xd8] sm:$0xff]
      %v562 = vld [vmem:[%s1 + $0xe0] sm:$0xff]
      %v563 = vld [vmem:[%s1 + $0xe8] sm:$0xff]
      %v564 = vld [vmem:[%s1 + $0xf0] sm:$0xff]
      %v565 = vld [vmem:[%s1 + $0xf8] sm:$0xff]
      %v566 = vld [vmem:[%s1 + $0x100] sm:$0xff]
      %v567 = vld [vmem:[%s1 + $0x108] sm:$0xff]
      %v568 = vld [vmem:[%s1 + $0x110] sm:$0xff]
      %v569 = vld [vmem:[%s1 + $0x118] sm:$0xff]
      %v570 = vld [vmem:[%s1 + $0x120] sm:$0xff]
      %v571 = vld [vmem:[%s1 + $0x128] sm:$0xff]
      %v572 = vld [vmem:[%s1 + $0x130] sm:$0xff]
      %v573 = vld [vmem:[%s1 + $0x138] sm:$0xff]
      %v574 = vld [vmem:[%s1 + $0x140] sm:$0xff]
      %v575 = vld [vmem:[%s1 + $0x148] sm:$0xff]
      %v576 = vld [vmem:[%s1 + $0x150] sm:$0xff]
      %v577 = vld [vmem:[%s1 + $0x158] sm:$0xff]
      %v578 = vld [vmem:[%s1 + $0x160] sm:$0xff]
      %v579 = vld [vmem:[%s1 + $0x168] sm:$0xff]
      %v580 = vld [vmem:[%s1 + $0x170] sm:$0xff]
      %v581 = vld [vmem:[%s1 + $0x178] sm:$0xff]
      %v582 = vld [vmem:[%s1 + $0x180] sm:$0xff]
      %v583 = vld [vmem:[%s1 + $0x188] sm:$0xff]
      %v584 = vld [vmem:[%s1 + $0x190] sm:$0xff]
      %v585 = vld [vmem:[%s1 + $0x198] sm:$0xff]
      %v586 = vld [vmem:[%s1 + $0x1a0] sm:$0xff]
      %v587 = vld [vmem:[%s1 + $0x1a8] sm:$0xff]
      %v588 = vld [vmem:[%s1 + $0x1b0] sm:$0xff]
      %v589 = vld [vmem:[%s1 + $0x1b8] sm:$0xff]
      %v590 = vld [vmem:[%s1 + $0x1c0] sm:$0xff]
      %v591 = vld [vmem:[%s1 + $0x1c8] sm:$0xff]
      %v592 = vld [vmem:[%s1 + $0x1d0] sm:$0xff]
      %v593 = vld [vmem:[%s1 + $0x1d8] sm:$0xff]
      %v594 = vld [vmem:[%s1 + $0x1e0] sm:$0xff]
      %v595 = vld [vmem:[%s1 + $0x1e8] sm:$0xff]
      %v596 = vld [vmem:[%s1 + $0x1f0] sm:$0xff]
      %v597 = vld [vmem:[%s1 + $0x1f8] sm:$0xff]
      %v598 = vld [vmem:[%s1 + $0x200] sm:$0xff]
      %v599 = vld [vmem:[%s1 + $0x208] sm:$0xff]
      %v600 = vld [vmem:[%s1 + $0x210] sm:$0xff]
      %v601 = vld [vmem:[%s1 + $0x218] sm:$0xff]
      %v602 = vld [vmem:[%s1 + $0x220] sm:$0xff]
      %v603 = vld [vmem:[%s1 + $0x228] sm:$0xff]
      %v604 = vld [vmem:[%s1 + $0x230] sm:$0xff]
      %v605 = vld [vmem:[%s1 + $0x238] sm:$0xff]
      %v606 = vld [vmem:[%s1 + $0x240] sm:$0xff]
      %v607 = vld [vmem:[%s1 + $0x248] sm:$0xff]
      %v608 = vld [vmem:[%s1 + $0x250] sm:$0xff]
      %v609 = vld [vmem:[%s1 + $0x258] sm:$0xff]
      %v610 = vld [vmem:[%s1 + $0x260] sm:$0xff]
      %v611 = vld [vmem:[%s1 + $0x268] sm:$0xff]
      %v612 = vld [vmem:[%s1 + $0x270] sm:$0xff]
      %v613 = vld [vmem:[%s1 + $0x278] sm:$0xff]
      %v614 = vld [vmem:[%s1 + $0x280] sm:$0xff]
      %v615 = vld [vmem:[%s1 + $0x288] sm:$0xff]
      %v616 = vld [vmem:[%s1 + $0x290] sm:$0xff]
      %v617 = vld [vmem:[%s1 + $0x298] sm:$0xff]
      %v618 = vld [vmem:[%s1 + $0x2a0] sm:$0xff]
      %v619 = vld [vmem:[%s1 + $0x2a8] sm:$0xff]
      %v620 = vld [vmem:[%s1 + $0x2b0] sm:$0xff]
      %v621 = vld [vmem:[%s1 + $0x2b8] sm:$0xff]
      %v622 = vld [vmem:[%s1 + $0x2c0] sm:$0xff]
      %v623 = vld [vmem:[%s1 + $0x2c8] sm:$0xff]
      %v624 = vld [vmem:[%s1 + $0x2d0] sm:$0xff]
      %v625 = vld [vmem:[%s1 + $0x2d8] sm:$0xff]
      %v626 = vld [vmem:[%s1 + $0x2e0] sm:$0xff]
      %v627 = vld [vmem:[%s1 + $0x2e8] sm:$0xff]
      %v628 = vld [vmem:[%s1 + $0x2f0] sm:$0xff]
      %v629 = vld [vmem:[%s1 + $0x2f8] sm:$0xff]
      %v630 = vld [vmem:[%s1 + $0x300] sm:$0xff]
      %v631 = vld [vmem:[%s1 + $0x308] sm:$0xff]
      %v632 = vld [vmem:[%s1 + $0x310] sm:$0xff]
      %v633 = vld [vmem:[%s1 + $0x318] sm:$0xff]
      %v634 = vld [vmem:[%s1 + $0x320] sm:$0xff]
      %v635 = vld [vmem:[%s1 + $0x328] sm:$0xff]
      %v636 = vld [vmem:[%s1 + $0x330] sm:$0xff]
      %v637 = vld [vmem:[%s1 + $0x338] sm:$0xff]
      %v638 = vld [vmem:[%s1 + $0x340] sm:$0xff]
      %v639 = vld [vmem:[%s1 + $0x348] sm:$0xff]
      %v640 = vld [vmem:[%s1 + $0x350] sm:$0xff]
      %v641 = vld [vmem:[%s1 + $0x358] sm:$0xff]
      %v642 = vld [vmem:[%s1 + $0x360] sm:$0xff]
      %v643 = vld [vmem:[%s1 + $0x368] sm:$0xff]
      %v644 = vld [vmem:[%s1 + $0x370] sm:$0xff]
      %v645 = vld [vmem:[%s1 + $0x378] sm:$0xff]
      %v646 = vld [vmem:[%s1 + $0x380] sm:$0xff]
      %v647 = vld [vmem:[%s1 + $0x388] sm:$0xff]
      %v648 = vld [vmem:[%s1 + $0x390] sm:$0xff]
      %v649 = vld [vmem:[%s1 + $0x398] sm:$0xff]
      %v650 = vld [vmem:[%s1 + $0x3a0] sm:$0xff]
      %v651 = vld [vmem:[%s1 + $0x3a8] sm:$0xff]
      %v652 = vld [vmem:[%s1 + $0x3b0] sm:$0xff]
      %v653 = vld [vmem:[%s1 + $0x3b8] sm:$0xff]
      %v654 = vld [vmem:[%s1 + $0x3c0] sm:$0xff]
      %v655 = vld [vmem:[%s1 + $0x3c8] sm:$0xff]
      %v656 = vld [vmem:[%s1 + $0x3d0] sm:$0xff]
      %v657 = vld [vmem:[%s1 + $0x3d8] sm:$0xff]
      %v658 = vld [vmem:[%s1 + $0x3e0] sm:$0xff]
      %v659 = vld [vmem:[%s1 + $0x3e8] sm:$0xff]
      %v660 = vld [vmem:[%s1 + $0x3f0] sm:$0xff]
      %v661 = vld [vmem:[%s1 + $0x3f8] sm:$0xff]
      %v662 = vld [vmem:[%s1 + $0x400] sm:$0xff]
      %v663 = vld [vmem:[%s1 + $0x408] sm:$0xff]
      %v664 = vld [vmem:[%s1 + $0x410] sm:$0xff]
      %v665 = vld [vmem:[%s1 + $0x418] sm:$0xff]
      %v666 = vld [vmem:[%s1 + $0x420] sm:$0xff]
      %v667 = vld [vmem:[%s1 + $0x428] sm:$0xff]
      %v668 = vld [vmem:[%s1 + $0x430] sm:$0xff]
      %v669 = vld [vmem:[%s1 + $0x438] sm:$0xff]
      %v670 = vld [vmem:[%s1 + $0x440] sm:$0xff]
      %v671 = vld [vmem:[%s1 + $0x448] sm:$0xff]
      %v672 = vld [vmem:[%s1 + $0x450] sm:$0xff]
      %v673 = vld [vmem:[%s1 + $0x458] sm:$0xff]
      %v674 = vld [vmem:[%s1 + $0x460] sm:$0xff]
      %v675 = vld [vmem:[%s1 + $0x468] sm:$0xff]
      %v676 = vld [vmem:[%s1 + $0x470] sm:$0xff]
      %v677 = vld [vmem:[%s1 + $0x478] sm:$0xff]
      %v678 = vld [vmem:[%s1 + $0x480] sm:$0xff]
      %v679 = vld [vmem:[%s1 + $0x488] sm:$0xff]
      %v680 = vld [vmem:[%s1 + $0x490] sm:$0xff]
      %v681 = vld [vmem:[%s1 + $0x498] sm:$0xff]
      %v682 = vld [vmem:[%s1 + $0x4a0] sm:$0xff]
      %v683 = vld [vmem:[%s1 + $0x4a8] sm:$0xff]
      %v684 = vld [vmem:[%s1 + $0x4b0] sm:$0xff]
      %v685 = vld [vmem:[%s1 + $0x4b8] sm:$0xff]
      %v686 = vld [vmem:[%s1 + $0x4c0] sm:$0xff]
      %v687 = vld [vmem:[%s1 + $0x4c8] sm:$0xff]
      %v688 = vld [vmem:[%s1 + $0x4d0] sm:$0xff]
      %v689 = vld [vmem:[%s1 + $0x4d8] sm:$0xff]
      %v690 = vld [vmem:[%s1 + $0x4e0] sm:$0xff]
      %v691 = vld [vmem:[%s1 + $0x4e8] sm:$0xff]
      %v692 = vld [vmem:[%s1 + $0x4f0] sm:$0xff]
      %v693 = vld [vmem:[%s1 + $0x4f8] sm:$0xff]
      %v694 = vld [vmem:[%s1 + $0x500] sm:$0xff]
      %v695 = vld [vmem:[%s1 + $0x508] sm:$0xff]
      %v696 = vld [vmem:[%s1 + $0x510] sm:$0xff]
      %v697 = vld [vmem:[%s1 + $0x518] sm:$0xff]
      %v698 = vld [vmem:[%s1 + $0x520] sm:$0xff]
      %v699 = vld [vmem:[%s1 + $0x528] sm:$0xff]
      %v700 = vld [vmem:[%s1 + $0x530] sm:$0xff]
      %v701 = vld [vmem:[%s1 + $0x538] sm:$0xff]
      %v702 = vld [vmem:[%s1 + $0x540] sm:$0xff]
      %v703 = vld [vmem:[%s1 + $0x548] sm:$0xff]
      %v704 = vld [vmem:[%s1 + $0x550] sm:$0xff]
      %v705 = vld [vmem:[%s1 + $0x558] sm:$0xff]
      %v706 = vld [vmem:[%s1 + $0x560] sm:$0xff]
      %v707 = vld [vmem:[%s1 + $0x568] sm:$0xff]
      %v708 = vld [vmem:[%s1 + $0x570] sm:$0xff]
      %v709 = vld [vmem:[%s1 + $0x578] sm:$0xff]
      %v710 = vld [vmem:[%s1 + $0x580] sm:$0xff]
      %v711 = vld [vmem:[%s1 + $0x588] sm:$0xff]
      %v712 = vld [vmem:[%s1 + $0x590] sm:$0xff]
      %v713 = vld [vmem:[%s1 + $0x598] sm:$0xff]
      %v714 = vld [vmem:[%s1 + $0x5a0] sm:$0xff]
      %v715 = vld [vmem:[%s1 + $0x5a8] sm:$0xff]
      %v716 = vld [vmem:[%s1 + $0x5b0] sm:$0xff]
      %v717 = vld [vmem:[%s1 + $0x5b8] sm:$0xff]
      %v718 = vld [vmem:[%s1 + $0x5c0] sm:$0xff]
      %v719 = vld [vmem:[%s1 + $0x5c8] sm:$0xff]
      %v720 = vld [vmem:[%s1 + $0x5d0] sm:$0xff]
      %v721 = vld [vmem:[%s1 + $0x5d8] sm:$0xff]
      %v722 = vld [vmem:[%s1 + $0x5e0] sm:$0xff]
      %v723 = vld [vmem:[%s1 + $0x5e8] sm:$0xff]
      %v724 = vld [vmem:[%s1 + $0x5f0] sm:$0xff]
      %v725 = vld [vmem:[%s1 + $0x5f8] sm:$0xff]
      %v726 = vld [vmem:[%s1 + $0x600] sm:$0xff]
      %v727 = vld [vmem:[%s1 + $0x608] sm:$0xff]
      %v728 = vld [vmem:[%s1 + $0x610] sm:$0xff]
      %v729 = vld [vmem:[%s1 + $0x618] sm:$0xff]
      %v730 = vld [vmem:[%s1 + $0x620] sm:$0xff]
      %v731 = vld [vmem:[%s1 + $0x628] sm:$0xff]
      %v732 = vld [vmem:[%s1 + $0x630] sm:$0xff]
      %v733 = vld [vmem:[%s1 + $0x638] sm:$0xff]
      %v734 = vld [vmem:[%s1 + $0x640] sm:$0xff]
      %v735 = vld [vmem:[%s1 + $0x648] sm:$0xff]
      %v736 = vld [vmem:[%s1 + $0x650] sm:$0xff]
      %v737 = vld [vmem:[%s1 + $0x658] sm:$0xff]
      %v738 = vld [vmem:[%s1 + $0x660] sm:$0xff]
      %v739 = vld [vmem:[%s1 + $0x668] sm:$0xff]
      %v740 = vld [vmem:[%s1 + $0x670] sm:$0xff]
      %v741 = vld [vmem:[%s1 + $0x678] sm:$0xff]
      %v742 = vld [vmem:[%s1 + $0x680] sm:$0xff]
      %v743 = vld [vmem:[%s1 + $0x688] sm:$0xff]
      %v744 = vld [vmem:[%s1 + $0x690] sm:$0xff]
      %v745 = vld [vmem:[%s1 + $0x698] sm:$0xff]
      %v746 = vld [vmem:[%s1 + $0x6a0] sm:$0xff]
      %v747 = vld [vmem:[%s1 + $0x6a8] sm:$0xff]
      %v748 = vld [vmem:[%s1 + $0x6b0] sm:$0xff]
      %v749 = vld [vmem:[%s1 + $0x6b8] sm:$0xff]
      %v750 = vld [vmem:[%s1 + $0x6c0] sm:$0xff]
      %v751 = vld [vmem:[%s1 + $0x6c8] sm:$0xff]
      %v752 = vld [vmem:[%s1 + $0x6d0] sm:$0xff]
      %v753 = vld [vmem:[%s1 + $0x6d8] sm:$0xff]
      %v754 = vld [vmem:[%s1 + $0x6e0] sm:$0xff]
      %v755 = vld [vmem:[%s1 + $0x6e8] sm:$0xff]
      %v756 = vld [vmem:[%s1 + $0x6f0] sm:$0xff]
      %v757 = vld [vmem:[%s1 + $0x6f8] sm:$0xff]
      %v758 = vld [vmem:[%s1 + $0x700] sm:$0xff]
      %v759 = vld [vmem:[%s1 + $0x708] sm:$0xff]
      %v760 = vld [vmem:[%s1 + $0x710] sm:$0xff]
      %v761 = vld [vmem:[%s1 + $0x718] sm:$0xff]
      %v762 = vld [vmem:[%s1 + $0x720] sm:$0xff]
      %v763 = vld [vmem:[%s1 + $0x728] sm:$0xff]
      %v764 = vld [vmem:[%s1 + $0x730] sm:$0xff]
      %v765 = vld [vmem:[%s1 + $0x738] sm:$0xff]
      %v766 = vld [vmem:[%s1 + $0x740] sm:$0xff]
      %v767 = vld [vmem:[%s1 + $0x748] sm:$0xff]
      %v768 = vld [vmem:[%s1 + $0x750] sm:$0xff]
      %v769 = vld [vmem:[%s1 + $0x758] sm:$0xff]
      %v770 = vld [vmem:[%s1 + $0x760] sm:$0xff]
      %v771 = vld [vmem:[%s1 + $0x768] sm:$0xff]
      %v772 = vld [vmem:[%s1 + $0x770] sm:$0xff]
      %v773 = vld [vmem:[%s1 + $0x778] sm:$0xff]
      %v774 = vld [vmem:[%s1 + $0x780] sm:$0xff]
      %v775 = vld [vmem:[%s1 + $0x788] sm:$0xff]
      %v776 = vld [vmem:[%s1 + $0x790] sm:$0xff]
      %v777 = vld [vmem:[%s1 + $0x798] sm:$0xff]
      %v778 = vld [vmem:[%s1 + $0x7a0] sm:$0xff]
      %v779 = vld [vmem:[%s1 + $0x7a8] sm:$0xff]
      %v780 = vld [vmem:[%s1 + $0x7b0] sm:$0xff]
      %v781 = vld [vmem:[%s1 + $0x7b8] sm:$0xff]
      %v782 = vld [vmem:[%s1 + $0x7c0] sm:$0xff]
      %v783 = vld [vmem:[%s1 + $0x7c8] sm:$0xff]
      %v784 = vld [vmem:[%s1 + $0x7d0] sm:$0xff]
      %v785 = vld [vmem:[%s1 + $0x7d8] sm:$0xff]
      %v786 = vld [vmem:[%s1 + $0x7e0] sm:$0xff]
      %v787 = vld [vmem:[%s1 + $0x7e8] sm:$0xff]
      %v788 = vld [vmem:[%s1 + $0x7f0] sm:$0xff]
      %v789 = vld [vmem:[%s1 + $0x7f8] sm:$0xff]
      %v790 = vld [vmem:[%s1 + $0x800] sm:$0xff]
      %v791 = vld [vmem:[%s1 + $0x808] sm:$0xff]
      %v792 = vld [vmem:[%s1 + $0x810] sm:$0xff]
      %v793 = vld [vmem:[%s1 + $0x818] sm:$0xff]
      %v794 = vld [vmem:[%s1 + $0x820] sm:$0xff]
      %v795 = vld [vmem:[%s1 + $0x828] sm:$0xff]
      %v796 = vld [vmem:[%s1 + $0x830] sm:$0xff]
      %v797 = vld [vmem:[%s1 + $0x838] sm:$0xff]
      %v798 = vld [vmem:[%s1 + $0x840] sm:$0xff]
      %v799 = vld [vmem:[%s1 + $0x848] sm:$0xff]
      %v800 = vld [vmem:[%s1 + $0x850] sm:$0xff]
      %v801 = vld [vmem:[%s1 + $0x858] sm:$0xff]
      %v802 = vld [vmem:[%s1 + $0x860] sm:$0xff]
      %v803 = vld [vmem:[%s1 + $0x868] sm:$0xff]
      %v804 = vld [vmem:[%s1 + $0x870] sm:$0xff]
      %v805 = vld [vmem:[%s1 + $0x878] sm:$0xff]
      %v806 = vld [vmem:[%s1 + $0x880] sm:$0xff]
      %v807 = vld [vmem:[%s1 + $0x888] sm:$0xff]
      %v808 = vld [vmem:[%s1 + $0x890] sm:$0xff]
      %v809 = vld [vmem:[%s1 + $0x898] sm:$0xff]
      %v810 = vld [vmem:[%s1 + $0x8a0] sm:$0xff]
      %v811 = vld [vmem:[%s1 + $0x8a8] sm:$0xff]
      %v812 = vld [vmem:[%s1 + $0x8b0] sm:$0xff]
      %v813 = vld [vmem:[%s1 + $0x8b8] sm:$0xff]
      %v814 = vld [vmem:[%s1 + $0x8c0] sm:$0xff]
      %v815 = vld [vmem:[%s1 + $0x8c8] sm:$0xff]
      %v816 = vld [vmem:[%s1 + $0x8d0] sm:$0xff]
      %v817 = vld [vmem:[%s1 + $0x8d8] sm:$0xff]
      %v818 = vld [vmem:[%s1 + $0x8e0] sm:$0xff]
      %v819 = vld [vmem:[%s1 + $0x8e8] sm:$0xff]
      %v820 = vld [vmem:[%s1 + $0x8f0] sm:$0xff]
      %v821 = vld [vmem:[%s1 + $0x8f8] sm:$0xff]
      %v822 = vld [vmem:[%s1 + $0x900] sm:$0xff]
      %v823 = vld [vmem:[%s1 + $0x908] sm:$0xff]
      %v824 = vld [vmem:[%s1 + $0x910] sm:$0xff]
      %v825 = vld [vmem:[%s1 + $0x918] sm:$0xff]
      %v826 = vld [vmem:[%s1 + $0x920] sm:$0xff]
      %v827 = vld [vmem:[%s1 + $0x928] sm:$0xff]
      %v828 = vld [vmem:[%s1 + $0x930] sm:$0xff]
      %v829 = vld [vmem:[%s1 + $0x938] sm:$0xff]
      %v830 = vld [vmem:[%s1 + $0x940] sm:$0xff]
      %v831 = vld [vmem:[%s1 + $0x948] sm:$0xff]
      %v832 = vld [vmem:[%s1 + $0x950] sm:$0xff]
      %v833 = vld [vmem:[%s1 + $0x958] sm:$0xff]
      %v834 = vld [vmem:[%s1 + $0x960] sm:$0xff]
      %v835 = vld [vmem:[%s1 + $0x968] sm:$0xff]
      %v836 = vld [vmem:[%s1 + $0x970] sm:$0xff]
      %v837 = vld [vmem:[%s1 + $0x978] sm:$0xff]
      %v838 = vld [vmem:[%s1 + $0x980] sm:$0xff]
      %v839 = vld [vmem:[%s1 + $0x988] sm:$0xff]
      %v840 = vld [vmem:[%s1 + $0x990] sm:$0xff]
      %v841 = vld [vmem:[%s1 + $0x998] sm:$0xff]
      %v842 = vld [vmem:[%s1 + $0x9a0] sm:$0xff]
      %v843 = vld [vmem:[%s1 + $0x9a8] sm:$0xff]
      %v844 = vld [vmem:[%s1 + $0x9b0] sm:$0xff]
      %v845 = vld [vmem:[%s1 + $0x9b8] sm:$0xff]
      %v846 = vld [vmem:[%s1 + $0x9c0] sm:$0xff]
      %v847 = vld [vmem:[%s1 + $0x9c8] sm:$0xff]
      %v848 = vld [vmem:[%s1 + $0x9d0] sm:$0xff]
      %v849 = vld [vmem:[%s1 + $0x9d8] sm:$0xff]
      %v850 = vld [vmem:[%s1 + $0x9e0] sm:$0xff]
      %v851 = vld [vmem:[%s1 + $0x9e8] sm:$0xff]
      %v852 = vld [vmem:[%s1 + $0x9f0] sm:$0xff]
      %v853 = vld [vmem:[%s1 + $0x9f8] sm:$0xff]
      %v854 = vld [vmem:[%s1 + $0xa00] sm:$0xff]
      %v855 = vld [vmem:[%s1 + $0xa08] sm:$0xff]
      %v856 = vld [vmem:[%s1 + $0xa10] sm:$0xff]
      %v857 = vld [vmem:[%s1 + $0xa18] sm:$0xff]
      %v858 = vld [vmem:[%s1 + $0xa20] sm:$0xff]
      %v859 = vld [vmem:[%s1 + $0xa28] sm:$0xff]
      %v860 = vld [vmem:[%s1 + $0xa30] sm:$0xff]
      %v861 = vld [vmem:[%s1 + $0xa38] sm:$0xff]
      %v862 = vld [vmem:[%s1 + $0xa40] sm:$0xff]
      %v863 = vld [vmem:[%s1 + $0xa48] sm:$0xff]
      %v864 = vld [vmem:[%s1 + $0xa50] sm:$0xff]
      %v865 = vld [vmem:[%s1 + $0xa58] sm:$0xff]
      %v866 = vld [vmem:[%s1 + $0xa60] sm:$0xff]
      %v867 = vld [vmem:[%s1 + $0xa68] sm:$0xff]
      %v868 = vld [vmem:[%s1 + $0xa70] sm:$0xff]
      %v869 = vld [vmem:[%s1 + $0xa78] sm:$0xff]
      %v870 = vld [vmem:[%s1 + $0xa80] sm:$0xff]
      %v871 = vld [vmem:[%s1 + $0xa88] sm:$0xff]
      %v872 = vld [vmem:[%s1 + $0xa90] sm:$0xff]
      %v873 = vld [vmem:[%s1 + $0xa98] sm:$0xff]
      %v874 = vld [vmem:[%s1 + $0xaa0] sm:$0xff]
      %v875 = vld [vmem:[%s1 + $0xaa8] sm:$0xff]
      %v876 = vld [vmem:[%s1 + $0xab0] sm:$0xff]
      %v877 = vld [vmem:[%s1 + $0xab8] sm:$0xff]
      %v878 = vld [vmem:[%s1 + $0xac0] sm:$0xff]
      %v879 = vld [vmem:[%s1 + $0xac8] sm:$0xff]
      %v880 = vld [vmem:[%s1 + $0xad0] sm:$0xff]
      %v881 = vld [vmem:[%s1 + $0xad8] sm:$0xff]
      %v882 = vld [vmem:[%s1 + $0xae0] sm:$0xff]
      %v883 = vld [vmem:[%s1 + $0xae8] sm:$0xff]
      %v884 = vld [vmem:[%s1 + $0xaf0] sm:$0xff]
      %v885 = vld [vmem:[%s1 + $0xaf8] sm:$0xff]
      %v886 = vld [vmem:[%s1 + $0xb00] sm:$0xff]
      %v887 = vld [vmem:[%s1 + $0xb08] sm:$0xff]
      %v888 = vld [vmem:[%s1 + $0xb10] sm:$0xff]
      %v889 = vld [vmem:[%s1 + $0xb18] sm:$0xff]
      %v890 = vld [vmem:[%s1 + $0xb20] sm:$0xff]
      %v891 = vld [vmem:[%s1 + $0xb28] sm:$0xff]
      %v892 = vld [vmem:[%s1 + $0xb30] sm:$0xff]
      %v893 = vld [vmem:[%s1 + $0xb38] sm:$0xff]
      %v894 = vld [vmem:[%s1 + $0xb40] sm:$0xff]
      %v895 = vld [vmem:[%s1 + $0xb48] sm:$0xff]
      %v896 = vld [vmem:[%s1 + $0xb50] sm:$0xff]
      %v897 = vld [vmem:[%s1 + $0xb58] sm:$0xff]
      %v898 = vld [vmem:[%s1 + $0xb60] sm:$0xff]
      %v899 = vld [vmem:[%s1 + $0xb68] sm:$0xff]
      %v900 = vld [vmem:[%s1 + $0xb70] sm:$0xff]
      %v901 = vld [vmem:[%s1 + $0xb78] sm:$0xff]
      %v902 = vld [vmem:[%s1 + $0xb80] sm:$0xff]
      %v903 = vld [vmem:[%s1 + $0xb88] sm:$0xff]
      %v904 = vld [vmem:[%s1 + $0xb90] sm:$0xff]
      %v905 = vld [vmem:[%s1 + $0xb98] sm:$0xff]
      %v906 = vld [vmem:[%s1 + $0xba0] sm:$0xff]
      %v907 = vld [vmem:[%s1 + $0xba8] sm:$0xff]
      %v908 = vld [vmem:[%s1 + $0xbb0] sm:$0xff]
      %v909 = vld [vmem:[%s1 + $0xbb8] sm:$0xff]
      %v910 = vld [vmem:[%s1 + $0xbc0] sm:$0xff]
      %v911 = vld [vmem:[%s1 + $0xbc8] sm:$0xff]
      %v912 = vld [vmem:[%s1 + $0xbd0] sm:$0xff]
      %v913 = vld [vmem:[%s1 + $0xbd8] sm:$0xff]
      %v914 = vld [vmem:[%s1 + $0xbe0] sm:$0xff]
      %v915 = vld [vmem:[%s1 + $0xbe8] sm:$0xff]
      %v916 = vld [vmem:[%s1 + $0xbf0] sm:$0xff]
      %v917 = vld [vmem:[%s1 + $0xbf8] sm:$0xff]
      %918 = vmatprep.subr.mxu0 0.0
      %919 = vmatpush1.msra.mxu0 %v534
      %920 = vmatprep.subr.mxu0 0.0
      %921 = vmatpush1.msra.mxu0 %v535
      %922 = vmatprep.subr.mxu0 0.0
      %923 = vmatpush1.msra.mxu0 %v536
      %924 = vmatprep.subr.mxu0 0.0
      %925 = vmatpush1.msra.mxu0 %v537
      %926 = vmatprep.subr.mxu0 0.0
      %927 = vmatpush1.msra.mxu0 %v538
      %928 = vmatprep.subr.mxu0 0.0
      %929 = vmatpush1.msra.mxu0 %v539
      %930 = vmatprep.subr.mxu0 0.0
      %931 = vmatpush1.msra.mxu0 %v540
      %932 = vmatprep.subr.mxu0 0.0
      %933 = vmatpush1.msra.mxu0 %v541
      %934 = vmatprep.subr.mxu0 0.0
      %935 = vmatpush1.msra.mxu0 %v542
      %936 = vmatprep.subr.mxu0 0.0
      %937 = vmatpush1.msra.mxu0 %v543
      %938 = vmatprep.subr.mxu0 0.0
      %939 = vmatpush1.msra.mxu0 %v544
      %940 = vmatprep.subr.mxu0 0.0
      %941 = vmatpush1.msra.mxu0 %v545
      %942 = vmatprep.subr.mxu0 0.0
      %943 = vmatpush1.msra.mxu0 %v546
      %944 = vmatprep.subr.mxu0 0.0
      %945 = vmatpush1.msra.mxu0 %v547
      %946 = vmatprep.subr.mxu0 0.0
      %947 = vmatpush1.msra.mxu0 %v548
      %948 = vmatprep.subr.mxu0 0.0
      %949 = vmatpush1.msra.mxu0 %v549
      %950 = vmatprep.subr.mxu0 0.0
      %951 = vmatpush1.msra.mxu0 %v550
      %952 = vmatprep.subr.mxu0 0.0
      %953 = vmatpush1.msra.mxu0 %v551
      %954 = vmatprep.subr.mxu0 0.0
      %955 = vmatpush1.msra.mxu0 %v552
      %956 = vmatprep.subr.mxu0 0.0
      %957 = vmatpush1.msra.mxu0 %v553
      %958 = vmatprep.subr.mxu0 0.0
      %959 = vmatpush1.msra.mxu0 %v554
      %960 = vmatprep.subr.mxu0 0.0
      %961 = vmatpush1.msra.mxu0 %v555
      %962 = vmatprep.subr.mxu0 0.0
      %963 = vmatpush1.msra.mxu0 %v556
      %964 = vmatprep.subr.mxu0 0.0
      %965 = vmatpush1.msra.mxu0 %v557
      %966 = vmatprep.subr.mxu0 0.0
      %967 = vmatpush1.msra.mxu0 %v558
      %968 = vmatprep.subr.mxu0 0.0
      %969 = vmatpush1.msra.mxu0 %v559
      %970 = vmatprep.subr.mxu0 0.0
      %971 = vmatpush1.msra.mxu0 %v560
      %972 = vmatprep.subr.mxu0 0.0
      %973 = vmatpush1.msra.mxu0 %v561
      %974 = vmatprep.subr.mxu0 0.0
      %975 = vmatpush1.msra.mxu0 %v562
      %976 = vmatprep.subr.mxu0 0.0
      %977 = vmatpush1.msra.mxu0 %v563
      %978 = vmatprep.subr.mxu0 0.0
      %979 = vmatpush1.msra.mxu0 %v564
      %980 = vmatprep.subr.mxu0 0.0
      %981 = vmatpush1.msra.mxu0 %v565
      %982 = vmatprep.mubr.f32.mxu0 %v151
      %983 = vmatmul.mubr.f32.gmra.mrb[0].mxu0 %v150
      %v984 = vpop.f32.mrb[0].mxu0
      %v985 = vadd.f32 0.0, %v984
      %v986 = vpop.f32.mrb[0].mxu0
      %987 = vmatprep.mubr.f32.mxu0 %v175
      %988 = vmatmul.mubr.f32.gmra.mrb[0].mxu0 %v174
      %v989 = vpop.f32.mrb[0].mxu0
      %v990 = vadd.f32 0.0, %v989
      %v991 = vpop.f32.mrb[0].mxu0
      %992 = vmatprep.mubr.f32.mxu0 %v199
      %993 = vmatmul.mubr.f32.gmra.mrb[0].mxu0 %v198
      %v994 = vpop.f32.mrb[0].mxu0
      %v995 = vadd.f32 0.0, %v994
      %v996 = vpop.f32.mrb[0].mxu0
      %997 = vmatprep.mubr.f32.mxu0 %v223
      %998 = vmatmul.mubr.f32.gmra.mrb[0].mxu0 %v222
      %v999 = vpop.f32.mrb[0].mxu0
      %v1000 = vadd.f32 0.0, %v999
      %v1001 = vpop.f32.mrb[0].mxu0
      %1002 = vmatprep.mubr.f32.mxu0 %v247
      %1003 = vmatmul.mubr.f32.gmra.mrb[0].mxu0 %v246
      %v1004 = vpop.f32.mrb[0].mxu0
      %v1005 = vadd.f32 0.0, %v1004
      %v1006 = vpop.f32.mrb[0].mxu0
      %1007 = vmatprep.mubr.f32.mxu0 %v271
      %1008 = vmatmul.mubr.f32.gmra.mrb[0].mxu0 %v270
      %v1009 = vpop.f32.mrb[0].mxu0
      %v1010 = vadd.f32 0.0, %v1009
      %v1011 = vpop.f32.mrb[0].mxu0
      %1012 = vmatprep.mubr.f32.mxu0 %v295
      %1013 = vmatmul.mubr.f32.gmra.mrb[0].mxu0 %v294
      %v1014 = vpop.f32.mrb[0].mxu0
      %v1015 = vadd.f32 0.0, %v1014
      %v1016 = vpop.f32.mrb[0].mxu0
      %1017 = vmatprep.mubr.f32.mxu0 %v319
      %1018 = vmatmul.mubr.f32.gmra.mrb[0].mxu0 %v318
      %v1019 = vpop.f32.mrb[0].mxu0
      %v1020 = vadd.f32 0.0, %v1019
      %v1021 = vpop.f32.mrb[0].mxu0
      %1022 = vmatprep.mubr.f32.mxu0 %v343
      %1023 = vmatmul.mubr.f32.gmra.mrb[0].mxu0 %v342
      %v1024 = vpop.f32.mrb[0].mxu0
      %v1025 = vadd.f32 0.0, %v1024
      %v1026 = vpop.f32.mrb[0].mxu0
      %1027 = vmatprep.mubr.f32.mxu0 %v367
      %1028 = vmatmul.mubr.f32.gmra.mrb[0].mxu0 %v366
      %v1029 = vpop.f32.mrb[0].mxu0
      %v1030 = vadd.f32 0.0, %v1029
      %v1031 = vpop.f32.mrb[0].mxu0
      %1032 = vmatprep.mubr.f32.mxu0 %v391
      %1033 = vmatmul.mubr.f32.gmra.mrb[0].mxu0 %v390
      %v1034 = vpop.f32.mrb[0].mxu0
      %v1035 = vadd.f32 0.0, %v1034
      %v1036 = vpop.f32.mrb[0].mxu0
      %1037 = vmatprep.mubr.f32.mxu0 %v415
      %1038 = vmatmul.mubr.f32.gmra.mrb[0].mxu0 %v414
      %v1039 = vpop.f32.mrb[0].mxu0
      %v1040 = vadd.f32 0.0, %v1039
      %v1041 = vpop.f32.mrb[0].mxu0
      %1042 = vmatprep.mubr.f32.mxu0 %v439
      %1043 = vmatmul.mubr.f32.gmra.mrb[0].mxu0 %v438
      %v1044 = vpop.f32.mrb[0].mxu0
      %v1045 = vadd.f32 0.0, %v1044
      %v1046 = vpop.f32.mrb[0].mxu0
      %1047 = vmatprep.mubr.f32.mxu0 %v463
      %1048 = vmatmul.mubr.f32.gmra.mrb[0].mxu0 %v462
      %v1049 = vpop.f32.mrb[0].mxu0
      %v1050 = vadd.f32 0.0, %v1049
      %v1051 = vpop.f32.mrb[0].mxu0
      %1052 = vmatprep.mubr.f32.mxu0 %v487
      %1053 = vmatmul.mubr.f32.gmra.mrb[0].mxu0 %v486
      %v1054 = vpop.f32.mrb[0].mxu0
      %v1055 = vadd.f32 0.0, %v1054
      %v1056 = vpop.f32.mrb[0].mxu0
      %1057 = vmatprep.mubr.f32.mxu0 %v511
      %1058 = vmatmul.mubr.f32.gmra.mrb[0].mxu0 %v510
      %v1059 = vpop.f32.mrb[0].mxu0
      %v1060 = vadd.f32 0.0, %v1059
      %v1061 = vpop.f32.mrb[0].mxu0
      %1062 = vdwg.mxu0
      %1063 = vmatprep.subr.mxu0 0.0
      %1064 = vmatpush1.msra.mxu0 %v566
      %1065 = vmatprep.subr.mxu0 0.0
      %1066 = vmatpush1.msra.mxu0 %v567
      %1067 = vmatprep.subr.mxu0 0.0
      %1068 = vmatpush1.msra.mxu0 %v568
      %1069 = vmatprep.subr.mxu0 0.0
      %1070 = vmatpush1.msra.mxu0 %v569
      %1071 = vmatprep.subr.mxu0 0.0
      %1072 = vmatpush1.msra.mxu0 %v570
      %1073 = vmatprep.subr.mxu0 0.0
      %1074 = vmatpush1.msra.mxu0 %v571
      %1075 = vmatprep.subr.mxu0 0.0
      %1076 = vmatpush1.msra.mxu0 %v572
      %1077 = vmatprep.subr.mxu0 0.0
      %1078 = vmatpush1.msra.mxu0 %v573
      %1079 = vmatprep.subr.mxu0 0.0
      %1080 = vmatpush1.msra.mxu0 %v574
      %1081 = vmatprep.subr.mxu0 0.0
      %1082 = vmatpush1.msra.mxu0 %v575
      %1083 = vmatprep.subr.mxu0 0.0
      %1084 = vmatpush1.msra.mxu0 %v576
      %1085 = vmatprep.subr.mxu0 0.0
      %1086 = vmatpush1.msra.mxu0 %v577
      %1087 = vmatprep.subr.mxu0 0.0
      %1088 = vmatpush1.msra.mxu0 %v578
      %1089 = vmatprep.subr.mxu0 0.0
      %1090 = vmatpush1.msra.mxu0 %v579
      %1091 = vmatprep.subr.mxu0 0.0
      %1092 = vmatpush1.msra.mxu0 %v580
      %1093 = vmatprep.subr.mxu0 0.0
      %1094 = vmatpush1.msra.mxu0 %v581
      %1095 = vmatprep.subr.mxu0 0.0
      %1096 = vmatpush1.msra.mxu0 %v582
      %1097 = vmatprep.subr.mxu0 0.0
      %1098 = vmatpush1.msra.mxu0 %v583
      %1099 = vmatprep.subr.mxu0 0.0
      %1100 = vmatpush1.msra.mxu0 %v584
      %1101 = vmatprep.subr.mxu0 0.0
      %1102 = vmatpush1.msra.mxu0 %v585
      %1103 = vmatprep.subr.mxu0 0.0
      %1104 = vmatpush1.msra.mxu0 %v586
      %1105 = vmatprep.subr.mxu0 0.0
      %1106 = vmatpush1.msra.mxu0 %v587
      %1107 = vmatprep.subr.mxu0 0.0
      %1108 = vmatpush1.msra.mxu0 %v588
      %1109 = vmatprep.subr.mxu0 0.0
      %1110 = vmatpush1.msra.mxu0 %v589
      %1111 = vmatprep.subr.mxu0 0.0
      %1112 = vmatpush1.msra.mxu0 %v590
      %1113 = vmatprep.subr.mxu0 0.0
      %1114 = vmatpush1.msra.mxu0 %v591
      %1115 = vmatprep.subr.mxu0 0.0
      %1116 = vmatpush1.msra.mxu0 %v592
      %1117 = vmatprep.subr.mxu0 0.0
      %1118 = vmatpush1.msra.mxu0 %v593
      %1119 = vmatprep.subr.mxu0 0.0
      %1120 = vmatpush1.msra.mxu0 %v594
      %1121 = vmatprep.subr.mxu0 0.0
      %1122 = vmatpush1.msra.mxu0 %v595
      %1123 = vmatprep.subr.mxu0 0.0
      %1124 = vmatpush1.msra.mxu0 %v596
      %1125 = vmatprep.subr.mxu0 0.0
      %1126 = vmatpush1.msra.mxu0 %v597
      %1127 = vmatprep.mubr.f32.mxu0 %v153
      %1128 = vmatmul.mubr.f32.gmra.mrb[0].mxu0 %v152
      %v1129 = vpop.f32.mrb[0].mxu0
      %v1130 = vadd.f32 %v985, %v1129
      %v1131 = vpop.f32.mrb[0].mxu0
      %1132 = vmatprep.mubr.f32.mxu0 %v177
      %1133 = vmatmul.mubr.f32.gmra.mrb[0].mxu0 %v176
      %v1134 = vpop.f32.mrb[0].mxu0
      %v1135 = vadd.f32 %v990, %v1134
      %v1136 = vpop.f32.mrb[0].mxu0
      %1137 = vmatprep.mubr.f32.mxu0 %v201
      %1138 = vmatmul.mubr.f32.gmra.mrb[0].mxu0 %v200
      %v1139 = vpop.f32.mrb[0].mxu0
      %v1140 = vadd.f32 %v995, %v1139
      %v1141 = vpop.f32.mrb[0].mxu0
      %1142 = vmatprep.mubr.f32.mxu0 %v225
      %1143 = vmatmul.mubr.f32.gmra.mrb[0].mxu0 %v224
      %v1144 = vpop.f32.mrb[0].mxu0
      %v1145 = vadd.f32 %v1000, %v1144
      %v1146 = vpop.f32.mrb[0].mxu0
      %1147 = vmatprep.mubr.f32.mxu0 %v249
      %1148 = vmatmul.mubr.f32.gmra.mrb[0].mxu0 %v248
      %v1149 = vpop.f32.mrb[0].mxu0
      %v1150 = vadd.f32 %v1005, %v1149
      %v1151 = vpop.f32.mrb[0].mxu0
      %1152 = vmatprep.mubr.f32.mxu0 %v273
      %1153 = vmatmul.mubr.f32.gmra.mrb[0].mxu0 %v272
      %v1154 = vpop.f32.mrb[0].mxu0
      %v1155 = vadd.f32 %v1010, %v1154
      %v1156 = vpop.f32.mrb[0].mxu0
      %1157 = vmatprep.mubr.f32.mxu0 %v297
      %1158 = vmatmul.mubr.f32.gmra.mrb[0].mxu0 %v296
      %v1159 = vpop.f32.mrb[0].mxu0
      %v1160 = vadd.f32 %v1015, %v1159
      %v1161 = vpop.f32.mrb[0].mxu0
      %1162 = vmatprep.mubr.f32.mxu0 %v321
      %1163 = vmatmul.mubr.f32.gmra.mrb[0].mxu0 %v320
      %v1164 = vpop.f32.mrb[0].mxu0
      %v1165 = vadd.f32 %v1020, %v1164
      %v1166 = vpop.f32.mrb[0].mxu0
      %1167 = vmatprep.mubr.f32.mxu0 %v345
      %1168 = vmatmul.mubr.f32.gmra.mrb[0].mxu0 %v344
      %v1169 = vpop.f32.mrb[0].mxu0
      %v1170 = vadd.f32 %v1025, %v1169
      %v1171 = vpop.f32.mrb[0].mxu0
      %1172 = vmatprep.mubr.f32.mxu0 %v369
      %1173 = vmatmul.mubr.f32.gmra.mrb[0].mxu0 %v368
      %v1174 = vpop.f32.mrb[0].mxu0
      %v1175 = vadd.f32 %v1030, %v1174
      %v1176 = vpop.f32.mrb[0].mxu0
      %1177 = vmatprep.mubr.f32.mxu0 %v393
      %1178 = vmatmul.mubr.f32.gmra.mrb[0].mxu0 %v392
      %v1179 = vpop.f32.mrb[0].mxu0
      %v1180 = vadd.f32 %v1035, %v1179
      %v1181 = vpop.f32.mrb[0].mxu0
      %1182 = vmatprep.mubr.f32.mxu0 %v417
      %1183 = vmatmul.mubr.f32.gmra.mrb[0].mxu0 %v416
      %v1184 = vpop.f32.mrb[0].mxu0
      %v1185 = vadd.f32 %v1040, %v1184
      %v1186 = vpop.f32.mrb[0].mxu0
      %1187 = vmatprep.mubr.f32.mxu0 %v441
      %1188 = vmatmul.mubr.f32.gmra.mrb[0].mxu0 %v440
      %v1189 = vpop.f32.mrb[0].mxu0
      %v1190 = vadd.f32 %v1045, %v1189
      %v1191 = vpop.f32.mrb[0].mxu0
      %1192 = vmatprep.mubr.f32.mxu0 %v465
      %1193 = vmatmul.mubr.f32.gmra.mrb[0].mxu0 %v464
      %v1194 = vpop.f32.mrb[0].mxu0
      %v1195 = vadd.f32 %v1050, %v1194
      %v1196 = vpop.f32.mrb[0].mxu0
      %1197 = vmatprep.mubr.f32.mxu0 %v489
      %1198 = vmatmul.mubr.f32.gmra.mrb[0].mxu0 %v488
      %v1199 = vpop.f32.mrb[0].mxu0
      %v1200 = vadd.f32 %v1055, %v1199
      %v1201 = vpop.f32.mrb[0].mxu0
      %1202 = vmatprep.mubr.f32.mxu0 %v513
      %1203 = vmatmul.mubr.f32.gmra.mrb[0].mxu0 %v512
      %v1204 = vpop.f32.mrb[0].mxu0
      %v1205 = vadd.f32 %v1060, %v1204
      %v1206 = vpop.f32.mrb[0].mxu0
      %1207 = vdwg.mxu0
      %1208 = vmatprep.subr.mxu0 0.0
      %1209 = vmatpush1.msra.mxu0 %v598
      %1210 = vmatprep.subr.mxu0 0.0
      %1211 = vmatpush1.msra.mxu0 %v599
      %1212 = vmatprep.subr.mxu0 0.0
      %1213 = vmatpush1.msra.mxu0 %v600
      %1214 = vmatprep.subr.mxu0 0.0
      %1215 = vmatpush1.msra.mxu0 %v601
      %1216 = vmatprep.subr.mxu0 0.0
      %1217 = vmatpush1.msra.mxu0 %v602
      %1218 = vmatprep.subr.mxu0 0.0
      %1219 = vmatpush1.msra.mxu0 %v603
      %1220 = vmatprep.subr.mxu0 0.0
      %1221 = vmatpush1.msra.mxu0 %v604
      %1222 = vmatprep.subr.mxu0 0.0
      %1223 = vmatpush1.msra.mxu0 %v605
      %1224 = vmatprep.subr.mxu0 0.0
      %1225 = vmatpush1.msra.mxu0 %v606
      %1226 = vmatprep.subr.mxu0 0.0
      %1227 = vmatpush1.msra.mxu0 %v607
      %1228 = vmatprep.subr.mxu0 0.0
      %1229 = vmatpush1.msra.mxu0 %v608
      %1230 = vmatprep.subr.mxu0 0.0
      %1231 = vmatpush1.msra.mxu0 %v609
      %1232 = vmatprep.subr.mxu0 0.0
      %1233 = vmatpush1.msra.mxu0 %v610
      %1234 = vmatprep.subr.mxu0 0.0
      %1235 = vmatpush1.msra.mxu0 %v611
      %1236 = vmatprep.subr.mxu0 0.0
      %1237 = vmatpush1.msra.mxu0 %v612
      %1238 = vmatprep.subr.mxu0 0.0
      %1239 = vmatpush1.msra.mxu0 %v613
      %1240 = vmatprep.subr.mxu0 0.0
      %1241 = vmatpush1.msra.mxu0 %v614
      %1242 = vmatprep.subr.mxu0 0.0
      %1243 = vmatpush1.msra.mxu0 %v615
      %1244 = vmatprep.subr.mxu0 0.0
      %1245 = vmatpush1.msra.mxu0 %v616
      %1246 = vmatprep.subr.mxu0 0.0
      %1247 = vmatpush1.msra.mxu0 %v617
      %1248 = vmatprep.subr.mxu0 0.0
      %1249 = vmatpush1.msra.mxu0 %v618
      %1250 = vmatprep.subr.mxu0 0.0
      %1251 = vmatpush1.msra.mxu0 %v619
      %1252 = vmatprep.subr.mxu0 0.0
      %1253 = vmatpush1.msra.mxu0 %v620
      %1254 = vmatprep.subr.mxu0 0.0
      %1255 = vmatpush1.msra.mxu0 %v621
      %1256 = vmatprep.subr.mxu0 0.0
      %1257 = vmatpush1.msra.mxu0 %v622
      %1258 = vmatprep.subr.mxu0 0.0
      %1259 = vmatpush1.msra.mxu0 %v623
      %1260 = vmatprep.subr.mxu0 0.0
      %1261 = vmatpush1.msra.mxu0 %v624
      %1262 = vmatprep.subr.mxu0 0.0
      %1263 = vmatpush1.msra.mxu0 %v625
      %1264 = vmatprep.subr.mxu0 0.0
      %1265 = vmatpush1.msra.mxu0 %v626
      %1266 = vmatprep.subr.mxu0 0.0
      %1267 = vmatpush1.msra.mxu0 %v627
      %1268 = vmatprep.subr.mxu0 0.0
      %1269 = vmatpush1.msra.mxu0 %v628
      %1270 = vmatprep.subr.mxu0 0.0
      %1271 = vmatpush1.msra.mxu0 %v629
      %1272 = vmatprep.mubr.f32.mxu0 %v155
      %1273 = vmatmul.mubr.f32.gmra.mrb[0].mxu0 %v154
      %v1274 = vpop.f32.mrb[0].mxu0
      %v1275 = vadd.f32 %v1130, %v1274
      %v1276 = vpop.f32.mrb[0].mxu0
      %1277 = vmatprep.mubr.f32.mxu0 %v179
      %1278 = vmatmul.mubr.f32.gmra.mrb[0].mxu0 %v178
      %v1279 = vpop.f32.mrb[0].mxu0
      %v1280 = vadd.f32 %v1135, %v1279
      %v1281 = vpop.f32.mrb[0].mxu0
      %1282 = vmatprep.mubr.f32.mxu0 %v203
      %1283 = vmatmul.mubr.f32.gmra.mrb[0].mxu0 %v202
      %v1284 = vpop.f32.mrb[0].mxu0
      %v1285 = vadd.f32 %v1140, %v1284
      %v1286 = vpop.f32.mrb[0].mxu0
      %1287 = vmatprep.mubr.f32.mxu0 %v227
      %1288 = vmatmul.mubr.f32.gmra.mrb[0].mxu0 %v226
      %v1289 = vpop.f32.mrb[0].mxu0
      %v1290 = vadd.f32 %v1145, %v1289
      %v1291 = vpop.f32.mrb[0].mxu0
      %1292 = vmatprep.mubr.f32.mxu0 %v251
      %1293 = vmatmul.mubr.f32.gmra.mrb[0].mxu0 %v250
      %v1294 = vpop.f32.mrb[0].mxu0
      %v1295 = vadd.f32 %v1150, %v1294
      %v1296 = vpop.f32.mrb[0].mxu0
      %1297 = vmatprep.mubr.f32.mxu0 %v275
      %1298 = vmatmul.mubr.f32.gmra.mrb[0].mxu0 %v274
      %v1299 = vpop.f32.mrb[0].mxu0
      %v1300 = vadd.f32 %v1155, %v1299
      %v1301 = vpop.f32.mrb[0].mxu0
      %1302 = vmatprep.mubr.f32.mxu0 %v299
      %1303 = vmatmul.mubr.f32.gmra.mrb[0].mxu0 %v298
      %v1304 = vpop.f32.mrb[0].mxu0
      %v1305 = vadd.f32 %v1160, %v1304
      %v1306 = vpop.f32.mrb[0].mxu0
      %1307 = vmatprep.mubr.f32.mxu0 %v323
      %1308 = vmatmul.mubr.f32.gmra.mrb[0].mxu0 %v322
      %v1309 = vpop.f32.mrb[0].mxu0
      %v1310 = vadd.f32 %v1165, %v1309
      %v1311 = vpop.f32.mrb[0].mxu0
      %1312 = vmatprep.mubr.f32.mxu0 %v347
      %1313 = vmatmul.mubr.f32.gmra.mrb[0].mxu0 %v346
      %v1314 = vpop.f32.mrb[0].mxu0
      %v1315 = vadd.f32 %v1170, %v1314
      %v1316 = vpop.f32.mrb[0].mxu0
      %1317 = vmatprep.mubr.f32.mxu0 %v371
      %1318 = vmatmul.mubr.f32.gmra.mrb[0].mxu0 %v370
      %v1319 = vpop.f32.mrb[0].mxu0
      %v1320 = vadd.f32 %v1175, %v1319
      %v1321 = vpop.f32.mrb[0].mxu0
      %1322 = vmatprep.mubr.f32.mxu0 %v395
      %1323 = vmatmul.mubr.f32.gmra.mrb[0].mxu0 %v394
      %v1324 = vpop.f32.mrb[0].mxu0
      %v1325 = vadd.f32 %v1180, %v1324
      %v1326 = vpop.f32.mrb[0].mxu0
      %1327 = vmatprep.mubr.f32.mxu0 %v419
      %1328 = vmatmul.mubr.f32.gmra.mrb[0].mxu0 %v418
      %v1329 = vpop.f32.mrb[0].mxu0
      %v1330 = vadd.f32 %v1185, %v1329
      %v1331 = vpop.f32.mrb[0].mxu0
      %1332 = vmatprep.mubr.f32.mxu0 %v443
      %1333 = vmatmul.mubr.f32.gmra.mrb[0].mxu0 %v442
      %v1334 = vpop.f32.mrb[0].mxu0
      %v1335 = vadd.f32 %v1190, %v1334
      %v1336 = vpop.f32.mrb[0].mxu0
      %1337 = vmatprep.mubr.f32.mxu0 %v467
      %1338 = vmatmul.mubr.f32.gmra.mrb[0].mxu0 %v466
      %v1339 = vpop.f32.mrb[0].mxu0
      %v1340 = vadd.f32 %v1195, %v1339
      %v1341 = vpop.f32.mrb[0].mxu0
      %1342 = vmatprep.mubr.f32.mxu0 %v491
      %1343 = vmatmul.mubr.f32.gmra.mrb[0].mxu0 %v490
      %v1344 = vpop.f32.mrb[0].mxu0
      %v1345 = vadd.f32 %v1200, %v1344
      %v1346 = vpop.f32.mrb[0].mxu0
      %1347 = vmatprep.mubr.f32.mxu0 %v515
      %1348 = vmatmul.mubr.f32.gmra.mrb[0].mxu0 %v514
      %v1349 = vpop.f32.mrb[0].mxu0
      %v1350 = vadd.f32 %v1205, %v1349
      %v1351 = vpop.f32.mrb[0].mxu0
      %1352 = vdwg.mxu0
      %1353 = vmatprep.subr.mxu0 0.0
      %1354 = vmatpush1.msra.mxu0 %v630
      %1355 = vmatprep.subr.mxu0 0.0
      %1356 = vmatpush1.msra.mxu0 %v631
      %1357 = vmatprep.subr.mxu0 0.0
      %1358 = vmatpush1.msra.mxu0 %v632
      %1359 = vmatprep.subr.mxu0 0.0
      %1360 = vmatpush1.msra.mxu0 %v633
      %1361 = vmatprep.subr.mxu0 0.0
      %1362 = vmatpush1.msra.mxu0 %v634
      %1363 = vmatprep.subr.mxu0 0.0
      %1364 = vmatpush1.msra.mxu0 %v635
      %1365 = vmatprep.subr.mxu0 0.0
      %1366 = vmatpush1.msra.mxu0 %v636
      %1367 = vmatprep.subr.mxu0 0.0
      %1368 = vmatpush1.msra.mxu0 %v637
      %1369 = vmatprep.subr.mxu0 0.0
      %1370 = vmatpush1.msra.mxu0 %v638
      %1371 = vmatprep.subr.mxu0 0.0
      %1372 = vmatpush1.msra.mxu0 %v639
      %1373 = vmatprep.subr.mxu0 0.0
      %1374 = vmatpush1.msra.mxu0 %v640
      %1375 = vmatprep.subr.mxu0 0.0
      %1376 = vmatpush1.msra.mxu0 %v641
      %1377 = vmatprep.subr.mxu0 0.0
      %1378 = vmatpush1.msra.mxu0 %v642
      %1379 = vmatprep.subr.mxu0 0.0
      %1380 = vmatpush1.msra.mxu0 %v643
      %1381 = vmatprep.subr.mxu0 0.0
      %1382 = vmatpush1.msra.mxu0 %v644
      %1383 = vmatprep.subr.mxu0 0.0
      %1384 = vmatpush1.msra.mxu0 %v645
      %1385 = vmatprep.subr.mxu0 0.0
      %1386 = vmatpush1.msra.mxu0 %v646
      %1387 = vmatprep.subr.mxu0 0.0
      %1388 = vmatpush1.msra.mxu0 %v647
      %1389 = vmatprep.subr.mxu0 0.0
      %1390 = vmatpush1.msra.mxu0 %v648
      %1391 = vmatprep.subr.mxu0 0.0
      %1392 = vmatpush1.msra.mxu0 %v649
      %1393 = vmatprep.subr.mxu0 0.0
      %1394 = vmatpush1.msra.mxu0 %v650
      %1395 = vmatprep.subr.mxu0 0.0
      %1396 = vmatpush1.msra.mxu0 %v651
      %1397 = vmatprep.subr.mxu0 0.0
      %1398 = vmatpush1.msra.mxu0 %v652
      %1399 = vmatprep.subr.mxu0 0.0
      %1400 = vmatpush1.msra.mxu0 %v653
      %1401 = vmatprep.subr.mxu0 0.0
      %1402 = vmatpush1.msra.mxu0 %v654
      %1403 = vmatprep.subr.mxu0 0.0
      %1404 = vmatpush1.msra.mxu0 %v655
      %1405 = vmatprep.subr.mxu0 0.0
      %1406 = vmatpush1.msra.mxu0 %v656
      %1407 = vmatprep.subr.mxu0 0.0
      %1408 = vmatpush1.msra.mxu0 %v657
      %1409 = vmatprep.subr.mxu0 0.0
      %1410 = vmatpush1.msra.mxu0 %v658
      %1411 = vmatprep.subr.mxu0 0.0
      %1412 = vmatpush1.msra.mxu0 %v659
      %1413 = vmatprep.subr.mxu0 0.0
      %1414 = vmatpush1.msra.mxu0 %v660
      %1415 = vmatprep.subr.mxu0 0.0
      %1416 = vmatpush1.msra.mxu0 %v661
      %1417 = vmatprep.mubr.f32.mxu0 %v157
      %1418 = vmatmul.mubr.f32.gmra.mrb[0].mxu0 %v156
      %v1419 = vpop.f32.mrb[0].mxu0
      %v1420 = vadd.f32 %v1275, %v1419
      %v1421 = vpop.f32.mrb[0].mxu0
      %1422 = vmatprep.mubr.f32.mxu0 %v181
      %1423 = vmatmul.mubr.f32.gmra.mrb[0].mxu0 %v180
      %v1424 = vpop.f32.mrb[0].mxu0
      %v1425 = vadd.f32 %v1280, %v1424
      %v1426 = vpop.f32.mrb[0].mxu0
      %1427 = vmatprep.mubr.f32.mxu0 %v205
      %1428 = vmatmul.mubr.f32.gmra.mrb[0].mxu0 %v204
      %v1429 = vpop.f32.mrb[0].mxu0
      %v1430 = vadd.f32 %v1285, %v1429
      %v1431 = vpop.f32.mrb[0].mxu0
      %1432 = vmatprep.mubr.f32.mxu0 %v229
      %1433 = vmatmul.mubr.f32.gmra.mrb[0].mxu0 %v228
      %v1434 = vpop.f32.mrb[0].mxu0
      %v1435 = vadd.f32 %v1290, %v1434
      %v1436 = vpop.f32.mrb[0].mxu0
      %1437 = vmatprep.mubr.f32.mxu0 %v253
      %1438 = vmatmul.mubr.f32.gmra.mrb[0].mxu0 %v252
      %v1439 = vpop.f32.mrb[0].mxu0
      %v1440 = vadd.f32 %v1295, %v1439
      %v1441 = vpop.f32.mrb[0].mxu0
      %1442 = vmatprep.mubr.f32.mxu0 %v277
      %1443 = vmatmul.mubr.f32.gmra.mrb[0].mxu0 %v276
      %v1444 = vpop.f32.mrb[0].mxu0
      %v1445 = vadd.f32 %v1300, %v1444
      %v1446 = vpop.f32.mrb[0].mxu0
      %1447 = vmatprep.mubr.f32.mxu0 %v301
      %1448 = vmatmul.mubr.f32.gmra.mrb[0].mxu0 %v300
      %v1449 = vpop.f32.mrb[0].mxu0
      %v1450 = vadd.f32 %v1305, %v1449
      %v1451 = vpop.f32.mrb[0].mxu0
      %1452 = vmatprep.mubr.f32.mxu0 %v325
      %1453 = vmatmul.mubr.f32.gmra.mrb[0].mxu0 %v324
      %v1454 = vpop.f32.mrb[0].mxu0
      %v1455 = vadd.f32 %v1310, %v1454
      %v1456 = vpop.f32.mrb[0].mxu0
      %1457 = vmatprep.mubr.f32.mxu0 %v349
      %1458 = vmatmul.mubr.f32.gmra.mrb[0].mxu0 %v348
      %v1459 = vpop.f32.mrb[0].mxu0
      %v1460 = vadd.f32 %v1315, %v1459
      %v1461 = vpop.f32.mrb[0].mxu0
      %1462 = vmatprep.mubr.f32.mxu0 %v373
      %1463 = vmatmul.mubr.f32.gmra.mrb[0].mxu0 %v372
      %v1464 = vpop.f32.mrb[0].mxu0
      %v1465 = vadd.f32 %v1320, %v1464
      %v1466 = vpop.f32.mrb[0].mxu0
      %1467 = vmatprep.mubr.f32.mxu0 %v397
      %1468 = vmatmul.mubr.f32.gmra.mrb[0].mxu0 %v396
      %v1469 = vpop.f32.mrb[0].mxu0
      %v1470 = vadd.f32 %v1325, %v1469
      %v1471 = vpop.f32.mrb[0].mxu0
      %1472 = vmatprep.mubr.f32.mxu0 %v421
      %1473 = vmatmul.mubr.f32.gmra.mrb[0].mxu0 %v420
      %v1474 = vpop.f32.mrb[0].mxu0
      %v1475 = vadd.f32 %v1330, %v1474
      %v1476 = vpop.f32.mrb[0].mxu0
      %1477 = vmatprep.mubr.f32.mxu0 %v445
      %1478 = vmatmul.mubr.f32.gmra.mrb[0].mxu0 %v444
      %v1479 = vpop.f32.mrb[0].mxu0
      %v1480 = vadd.f32 %v1335, %v1479
      %v1481 = vpop.f32.mrb[0].mxu0
      %1482 = vmatprep.mubr.f32.mxu0 %v469
      %1483 = vmatmul.mubr.f32.gmra.mrb[0].mxu0 %v468
      %v1484 = vpop.f32.mrb[0].mxu0
      %v1485 = vadd.f32 %v1340, %v1484
      %v1486 = vpop.f32.mrb[0].mxu0
      %1487 = vmatprep.mubr.f32.mxu0 %v493
      %1488 = vmatmul.mubr.f32.gmra.mrb[0].mxu0 %v492
      %v1489 = vpop.f32.mrb[0].mxu0
      %v1490 = vadd.f32 %v1345, %v1489
      %v1491 = vpop.f32.mrb[0].mxu0
      %1492 = vmatprep.mubr.f32.mxu0 %v517
      %1493 = vmatmul.mubr.f32.gmra.mrb[0].mxu0 %v516
      %v1494 = vpop.f32.mrb[0].mxu0
      %v1495 = vadd.f32 %v1350, %v1494
      %v1496 = vpop.f32.mrb[0].mxu0
      %1497 = vdwg.mxu0
      %1498 = vmatprep.subr.mxu0 0.0
      %1499 = vmatpush1.msra.mxu0 %v662
      %1500 = vmatprep.subr.mxu0 0.0
      %1501 = vmatpush1.msra.mxu0 %v663
      %1502 = vmatprep.subr.mxu0 0.0
      %1503 = vmatpush1.msra.mxu0 %v664
      %1504 = vmatprep.subr.mxu0 0.0
      %1505 = vmatpush1.msra.mxu0 %v665
      %1506 = vmatprep.subr.mxu0 0.0
      %1507 = vmatpush1.msra.mxu0 %v666
      %1508 = vmatprep.subr.mxu0 0.0
      %1509 = vmatpush1.msra.mxu0 %v667
      %1510 = vmatprep.subr.mxu0 0.0
      %1511 = vmatpush1.msra.mxu0 %v668
      %1512 = vmatprep.subr.mxu0 0.0
      %1513 = vmatpush1.msra.mxu0 %v669
      %1514 = vmatprep.subr.mxu0 0.0
      %1515 = vmatpush1.msra.mxu0 %v670
      %1516 = vmatprep.subr.mxu0 0.0
      %1517 = vmatpush1.msra.mxu0 %v671
      %1518 = vmatprep.subr.mxu0 0.0
      %1519 = vmatpush1.msra.mxu0 %v672
      %1520 = vmatprep.subr.mxu0 0.0
      %1521 = vmatpush1.msra.mxu0 %v673
      %1522 = vmatprep.subr.mxu0 0.0
      %1523 = vmatpush1.msra.mxu0 %v674
      %1524 = vmatprep.subr.mxu0 0.0
      %1525 = vmatpush1.msra.mxu0 %v675
      %1526 = vmatprep.subr.mxu0 0.0
      %1527 = vmatpush1.msra.mxu0 %v676
      %1528 = vmatprep.subr.mxu0 0.0
      %1529 = vmatpush1.msra.mxu0 %v677
      %1530 = vmatprep.subr.mxu0 0.0
      %1531 = vmatpush1.msra.mxu0 %v678
      %1532 = vmatprep.subr.mxu0 0.0
      %1533 = vmatpush1.msra.mxu0 %v679
      %1534 = vmatprep.subr.mxu0 0.0
      %1535 = vmatpush1.msra.mxu0 %v680
      %1536 = vmatprep.subr.mxu0 0.0
      %1537 = vmatpush1.msra.mxu0 %v681
      %1538 = vmatprep.subr.mxu0 0.0
      %1539 = vmatpush1.msra.mxu0 %v682
      %1540 = vmatprep.subr.mxu0 0.0
      %1541 = vmatpush1.msra.mxu0 %v683
      %1542 = vmatprep.subr.mxu0 0.0
      %1543 = vmatpush1.msra.mxu0 %v684
      %1544 = vmatprep.subr.mxu0 0.0
      %1545 = vmatpush1.msra.mxu0 %v685
      %1546 = vmatprep.subr.mxu0 0.0
      %1547 = vmatpush1.msra.mxu0 %v686
      %1548 = vmatprep.subr.mxu0 0.0
      %1549 = vmatpush1.msra.mxu0 %v687
      %1550 = vmatprep.subr.mxu0 0.0
      %1551 = vmatpush1.msra.mxu0 %v688
      %1552 = vmatprep.subr.mxu0 0.0
      %1553 = vmatpush1.msra.mxu0 %v689
      %1554 = vmatprep.subr.mxu0 0.0
      %1555 = vmatpush1.msra.mxu0 %v690
      %1556 = vmatprep.subr.mxu0 0.0
      %1557 = vmatpush1.msra.mxu0 %v691
      %1558 = vmatprep.subr.mxu0 0.0
      %1559 = vmatpush1.msra.mxu0 %v692
      %1560 = vmatprep.subr.mxu0 0.0
      %1561 = vmatpush1.msra.mxu0 %v693
      %1562 = vmatprep.mubr.f32.mxu0 %v159
      %1563 = vmatmul.mubr.f32.gmra.mrb[0].mxu0 %v158
      %v1564 = vpop.f32.mrb[0].mxu0
      %v1565 = vadd.f32 %v1420, %v1564
      %v1566 = vpop.f32.mrb[0].mxu0
      %1567 = vmatprep.mubr.f32.mxu0 %v183
      %1568 = vmatmul.mubr.f32.gmra.mrb[0].mxu0 %v182
      %v1569 = vpop.f32.mrb[0].mxu0
      %v1570 = vadd.f32 %v1425, %v1569
      %v1571 = vpop.f32.mrb[0].mxu0
      %1572 = vmatprep.mubr.f32.mxu0 %v207
      %1573 = vmatmul.mubr.f32.gmra.mrb[0].mxu0 %v206
      %v1574 = vpop.f32.mrb[0].mxu0
      %v1575 = vadd.f32 %v1430, %v1574
      %v1576 = vpop.f32.mrb[0].mxu0
      %1577 = vmatprep.mubr.f32.mxu0 %v231
      %1578 = vmatmul.mubr.f32.gmra.mrb[0].mxu0 %v230
      %v1579 = vpop.f32.mrb[0].mxu0
      %v1580 = vadd.f32 %v1435, %v1579
      %v1581 = vpop.f32.mrb[0].mxu0
      %1582 = vmatprep.mubr.f32.mxu0 %v255
      %1583 = vmatmul.mubr.f32.gmra.mrb[0].mxu0 %v254
      %v1584 = vpop.f32.mrb[0].mxu0
      %v1585 = vadd.f32 %v1440, %v1584
      %v1586 = vpop.f32.mrb[0].mxu0
      %1587 = vmatprep.mubr.f32.mxu0 %v279
      %1588 = vmatmul.mubr.f32.gmra.mrb[0].mxu0 %v278
      %v1589 = vpop.f32.mrb[0].mxu0
      %v1590 = vadd.f32 %v1445, %v1589
      %v1591 = vpop.f32.mrb[0].mxu0
      %1592 = vmatprep.mubr.f32.mxu0 %v303
      %1593 = vmatmul.mubr.f32.gmra.mrb[0].mxu0 %v302
      %v1594 = vpop.f32.mrb[0].mxu0
      %v1595 = vadd.f32 %v1450, %v1594
      %v1596 = vpop.f32.mrb[0].mxu0
      %1597 = vmatprep.mubr.f32.mxu0 %v327
      %1598 = vmatmul.mubr.f32.gmra.mrb[0].mxu0 %v326
      %v1599 = vpop.f32.mrb[0].mxu0
      %v1600 = vadd.f32 %v1455, %v1599
      %v1601 = vpop.f32.mrb[0].mxu0
      %1602 = vmatprep.mubr.f32.mxu0 %v351
      %1603 = vmatmul.mubr.f32.gmra.mrb[0].mxu0 %v350
      %v1604 = vpop.f32.mrb[0].mxu0
      %v1605 = vadd.f32 %v1460, %v1604
      %v1606 = vpop.f32.mrb[0].mxu0
      %1607 = vmatprep.mubr.f32.mxu0 %v375
      %1608 = vmatmul.mubr.f32.gmra.mrb[0].mxu0 %v374
      %v1609 = vpop.f32.mrb[0].mxu0
      %v1610 = vadd.f32 %v1465, %v1609
      %v1611 = vpop.f32.mrb[0].mxu0
      %1612 = vmatprep.mubr.f32.mxu0 %v399
      %1613 = vmatmul.mubr.f32.gmra.mrb[0].mxu0 %v398
      %v1614 = vpop.f32.mrb[0].mxu0
      %v1615 = vadd.f32 %v1470, %v1614
      %v1616 = vpop.f32.mrb[0].mxu0
      %1617 = vmatprep.mubr.f32.mxu0 %v423
      %1618 = vmatmul.mubr.f32.gmra.mrb[0].mxu0 %v422
      %v1619 = vpop.f32.mrb[0].mxu0
      %v1620 = vadd.f32 %v1475, %v1619
      %v1621 = vpop.f32.mrb[0].mxu0
      %1622 = vmatprep.mubr.f32.mxu0 %v447
      %1623 = vmatmul.mubr.f32.gmra.mrb[0].mxu0 %v446
      %v1624 = vpop.f32.mrb[0].mxu0
      %v1625 = vadd.f32 %v1480, %v1624
      %v1626 = vpop.f32.mrb[0].mxu0
      %1627 = vmatprep.mubr.f32.mxu0 %v471
      %1628 = vmatmul.mubr.f32.gmra.mrb[0].mxu0 %v470
      %v1629 = vpop.f32.mrb[0].mxu0
      %v1630 = vadd.f32 %v1485, %v1629
      %v1631 = vpop.f32.mrb[0].mxu0
      %1632 = vmatprep.mubr.f32.mxu0 %v495
      %1633 = vmatmul.mubr.f32.gmra.mrb[0].mxu0 %v494
      %v1634 = vpop.f32.mrb[0].mxu0
      %v1635 = vadd.f32 %v1490, %v1634
      %v1636 = vpop.f32.mrb[0].mxu0
      %1637 = vmatprep.mubr.f32.mxu0 %v519
      %1638 = vmatmul.mubr.f32.gmra.mrb[0].mxu0 %v518
      %v1639 = vpop.f32.mrb[0].mxu0
      %v1640 = vadd.f32 %v1495, %v1639
      %v1641 = vpop.f32.mrb[0].mxu0
      %1642 = vdwg.mxu0
      %1643 = vmatprep.subr.mxu0 0.0
      %1644 = vmatpush1.msra.mxu0 %v694
      %1645 = vmatprep.subr.mxu0 0.0
      %1646 = vmatpush1.msra.mxu0 %v695
      %1647 = vmatprep.subr.mxu0 0.0
      %1648 = vmatpush1.msra.mxu0 %v696
      %1649 = vmatprep.subr.mxu0 0.0
      %1650 = vmatpush1.msra.mxu0 %v697
      %1651 = vmatprep.subr.mxu0 0.0
      %1652 = vmatpush1.msra.mxu0 %v698
      %1653 = vmatprep.subr.mxu0 0.0
      %1654 = vmatpush1.msra.mxu0 %v699
      %1655 = vmatprep.subr.mxu0 0.0
      %1656 = vmatpush1.msra.mxu0 %v700
      %1657 = vmatprep.subr.mxu0 0.0
      %1658 = vmatpush1.msra.mxu0 %v701
      %1659 = vmatprep.subr.mxu0 0.0
      %1660 = vmatpush1.msra.mxu0 %v702
      %1661 = vmatprep.subr.mxu0 0.0
      %1662 = vmatpush1.msra.mxu0 %v703
      %1663 = vmatprep.subr.mxu0 0.0
      %1664 = vmatpush1.msra.mxu0 %v704
      %1665 = vmatprep.subr.mxu0 0.0
      %1666 = vmatpush1.msra.mxu0 %v705
      %1667 = vmatprep.subr.mxu0 0.0
      %1668 = vmatpush1.msra.mxu0 %v706
      %1669 = vmatprep.subr.mxu0 0.0
      %1670 = vmatpush1.msra.mxu0 %v707
      %1671 = vmatprep.subr.mxu0 0.0
      %1672 = vmatpush1.msra.mxu0 %v708
      %1673 = vmatprep.subr.mxu0 0.0
      %1674 = vmatpush1.msra.mxu0 %v709
      %1675 = vmatprep.subr.mxu0 0.0
      %1676 = vmatpush1.msra.mxu0 %v710
      %1677 = vmatprep.subr.mxu0 0.0
      %1678 = vmatpush1.msra.mxu0 %v711
      %1679 = vmatprep.subr.mxu0 0.0
      %1680 = vmatpush1.msra.mxu0 %v712
      %1681 = vmatprep.subr.mxu0 0.0
      %1682 = vmatpush1.msra.mxu0 %v713
      %1683 = vmatprep.subr.mxu0 0.0
      %1684 = vmatpush1.msra.mxu0 %v714
      %1685 = vmatprep.subr.mxu0 0.0
      %1686 = vmatpush1.msra.mxu0 %v715
      %1687 = vmatprep.subr.mxu0 0.0
      %1688 = vmatpush1.msra.mxu0 %v716
      %1689 = vmatprep.subr.mxu0 0.0
      %1690 = vmatpush1.msra.mxu0 %v717
      %1691 = vmatprep.subr.mxu0 0.0
      %1692 = vmatpush1.msra.mxu0 %v718
      %1693 = vmatprep.subr.mxu0 0.0
      %1694 = vmatpush1.msra.mxu0 %v719
      %1695 = vmatprep.subr.mxu0 0.0
      %1696 = vmatpush1.msra.mxu0 %v720
      %1697 = vmatprep.subr.mxu0 0.0
      %1698 = vmatpush1.msra.mxu0 %v721
      %1699 = vmatprep.subr.mxu0 0.0
      %1700 = vmatpush1.msra.mxu0 %v722
      %1701 = vmatprep.subr.mxu0 0.0
      %1702 = vmatpush1.msra.mxu0 %v723
      %1703 = vmatprep.subr.mxu0 0.0
      %1704 = vmatpush1.msra.mxu0 %v724
      %1705 = vmatprep.subr.mxu0 0.0
      %1706 = vmatpush1.msra.mxu0 %v725
      %1707 = vmatprep.mubr.f32.mxu0 %v161
      %1708 = vmatmul.mubr.f32.gmra.mrb[0].mxu0 %v160
      %v1709 = vpop.f32.mrb[0].mxu0
      %v1710 = vadd.f32 %v1565, %v1709
      %v1711 = vpop.f32.mrb[0].mxu0
      %1712 = vmatprep.mubr.f32.mxu0 %v185
      %1713 = vmatmul.mubr.f32.gmra.mrb[0].mxu0 %v184
      %v1714 = vpop.f32.mrb[0].mxu0
      %v1715 = vadd.f32 %v1570, %v1714
      %v1716 = vpop.f32.mrb[0].mxu0
      %1717 = vmatprep.mubr.f32.mxu0 %v209
      %1718 = vmatmul.mubr.f32.gmra.mrb[0].mxu0 %v208
      %v1719 = vpop.f32.mrb[0].mxu0
      %v1720 = vadd.f32 %v1575, %v1719
      %v1721 = vpop.f32.mrb[0].mxu0
      %1722 = vmatprep.mubr.f32.mxu0 %v233
      %1723 = vmatmul.mubr.f32.gmra.mrb[0].mxu0 %v232
      %v1724 = vpop.f32.mrb[0].mxu0
      %v1725 = vadd.f32 %v1580, %v1724
      %v1726 = vpop.f32.mrb[0].mxu0
      %1727 = vmatprep.mubr.f32.mxu0 %v257
      %1728 = vmatmul.mubr.f32.gmra.mrb[0].mxu0 %v256
      %v1729 = vpop.f32.mrb[0].mxu0
      %v1730 = vadd.f32 %v1585, %v1729
      %v1731 = vpop.f32.mrb[0].mxu0
      %1732 = vmatprep.mubr.f32.mxu0 %v281
      %1733 = vmatmul.mubr.f32.gmra.mrb[0].mxu0 %v280
      %v1734 = vpop.f32.mrb[0].mxu0
      %v1735 = vadd.f32 %v1590, %v1734
      %v1736 = vpop.f32.mrb[0].mxu0
      %1737 = vmatprep.mubr.f32.mxu0 %v305
      %1738 = vmatmul.mubr.f32.gmra.mrb[0].mxu0 %v304
      %v1739 = vpop.f32.mrb[0].mxu0
      %v1740 = vadd.f32 %v1595, %v1739
      %v1741 = vpop.f32.mrb[0].mxu0
      %1742 = vmatprep.mubr.f32.mxu0 %v329
      %1743 = vmatmul.mubr.f32.gmra.mrb[0].mxu0 %v328
      %v1744 = vpop.f32.mrb[0].mxu0
      %v1745 = vadd.f32 %v1600, %v1744
      %v1746 = vpop.f32.mrb[0].mxu0
      %1747 = vmatprep.mubr.f32.mxu0 %v353
      %1748 = vmatmul.mubr.f32.gmra.mrb[0].mxu0 %v352
      %v1749 = vpop.f32.mrb[0].mxu0
      %v1750 = vadd.f32 %v1605, %v1749
      %v1751 = vpop.f32.mrb[0].mxu0
      %1752 = vmatprep.mubr.f32.mxu0 %v377
      %1753 = vmatmul.mubr.f32.gmra.mrb[0].mxu0 %v376
      %v1754 = vpop.f32.mrb[0].mxu0
      %v1755 = vadd.f32 %v1610, %v1754
      %v1756 = vpop.f32.mrb[0].mxu0
      %1757 = vmatprep.mubr.f32.mxu0 %v401
      %1758 = vmatmul.mubr.f32.gmra.mrb[0].mxu0 %v400
      %v1759 = vpop.f32.mrb[0].mxu0
      %v1760 = vadd.f32 %v1615, %v1759
      %v1761 = vpop.f32.mrb[0].mxu0
      %1762 = vmatprep.mubr.f32.mxu0 %v425
      %1763 = vmatmul.mubr.f32.gmra.mrb[0].mxu0 %v424
      %v1764 = vpop.f32.mrb[0].mxu0
      %v1765 = vadd.f32 %v1620, %v1764
      %v1766 = vpop.f32.mrb[0].mxu0
      %1767 = vmatprep.mubr.f32.mxu0 %v449
      %1768 = vmatmul.mubr.f32.gmra.mrb[0].mxu0 %v448
      %v1769 = vpop.f32.mrb[0].mxu0
      %v1770 = vadd.f32 %v1625, %v1769
      %v1771 = vpop.f32.mrb[0].mxu0
      %1772 = vmatprep.mubr.f32.mxu0 %v473
      %1773 = vmatmul.mubr.f32.gmra.mrb[0].mxu0 %v472
      %v1774 = vpop.f32.mrb[0].mxu0
      %v1775 = vadd.f32 %v1630, %v1774
      %v1776 = vpop.f32.mrb[0].mxu0
      %1777 = vmatprep.mubr.f32.mxu0 %v497
      %1778 = vmatmul.mubr.f32.gmra.mrb[0].mxu0 %v496
      %v1779 = vpop.f32.mrb[0].mxu0
      %v1780 = vadd.f32 %v1635, %v1779
      %v1781 = vpop.f32.mrb[0].mxu0
      %1782 = vmatprep.mubr.f32.mxu0 %v521
      %1783 = vmatmul.mubr.f32.gmra.mrb[0].mxu0 %v520
      %v1784 = vpop.f32.mrb[0].mxu0
      %v1785 = vadd.f32 %v1640, %v1784
      %v1786 = vpop.f32.mrb[0].mxu0
      %1787 = vdwg.mxu0
      %1788 = vmatprep.subr.mxu0 0.0
      %1789 = vmatpush1.msra.mxu0 %v726
      %1790 = vmatprep.subr.mxu0 0.0
      %1791 = vmatpush1.msra.mxu0 %v727
      %1792 = vmatprep.subr.mxu0 0.0
      %1793 = vmatpush1.msra.mxu0 %v728
      %1794 = vmatprep.subr.mxu0 0.0
      %1795 = vmatpush1.msra.mxu0 %v729
      %1796 = vmatprep.subr.mxu0 0.0
      %1797 = vmatpush1.msra.mxu0 %v730
      %1798 = vmatprep.subr.mxu0 0.0
      %1799 = vmatpush1.msra.mxu0 %v731
      %1800 = vmatprep.subr.mxu0 0.0
      %1801 = vmatpush1.msra.mxu0 %v732
      %1802 = vmatprep.subr.mxu0 0.0
      %1803 = vmatpush1.msra.mxu0 %v733
      %1804 = vmatprep.subr.mxu0 0.0
      %1805 = vmatpush1.msra.mxu0 %v734
      %1806 = vmatprep.subr.mxu0 0.0
      %1807 = vmatpush1.msra.mxu0 %v735
      %1808 = vmatprep.subr.mxu0 0.0
      %1809 = vmatpush1.msra.mxu0 %v736
      %1810 = vmatprep.subr.mxu0 0.0
      %1811 = vmatpush1.msra.mxu0 %v737
      %1812 = vmatprep.subr.mxu0 0.0
      %1813 = vmatpush1.msra.mxu0 %v738
      %1814 = vmatprep.subr.mxu0 0.0
      %1815 = vmatpush1.msra.mxu0 %v739
      %1816 = vmatprep.subr.mxu0 0.0
      %1817 = vmatpush1.msra.mxu0 %v740
      %1818 = vmatprep.subr.mxu0 0.0
      %1819 = vmatpush1.msra.mxu0 %v741
      %1820 = vmatprep.subr.mxu0 0.0
      %1821 = vmatpush1.msra.mxu0 %v742
      %1822 = vmatprep.subr.mxu0 0.0
      %1823 = vmatpush1.msra.mxu0 %v743
      %1824 = vmatprep.subr.mxu0 0.0
      %1825 = vmatpush1.msra.mxu0 %v744
      %1826 = vmatprep.subr.mxu0 0.0
      %1827 = vmatpush1.msra.mxu0 %v745
      %1828 = vmatprep.subr.mxu0 0.0
      %1829 = vmatpush1.msra.mxu0 %v746
      %1830 = vmatprep.subr.mxu0 0.0
      %1831 = vmatpush1.msra.mxu0 %v747
      %1832 = vmatprep.subr.mxu0 0.0
      %1833 = vmatpush1.msra.mxu0 %v748
      %1834 = vmatprep.subr.mxu0 0.0
      %1835 = vmatpush1.msra.mxu0 %v749
      %1836 = vmatprep.subr.mxu0 0.0
      %1837 = vmatpush1.msra.mxu0 %v750
      %1838 = vmatprep.subr.mxu0 0.0
      %1839 = vmatpush1.msra.mxu0 %v751
      %1840 = vmatprep.subr.mxu0 0.0
      %1841 = vmatpush1.msra.mxu0 %v752
      %1842 = vmatprep.subr.mxu0 0.0
      %1843 = vmatpush1.msra.mxu0 %v753
      %1844 = vmatprep.subr.mxu0 0.0
      %1845 = vmatpush1.msra.mxu0 %v754
      %1846 = vmatprep.subr.mxu0 0.0
      %1847 = vmatpush1.msra.mxu0 %v755
      %1848 = vmatprep.subr.mxu0 0.0
      %1849 = vmatpush1.msra.mxu0 %v756
      %1850 = vmatprep.subr.mxu0 0.0
      %1851 = vmatpush1.msra.mxu0 %v757
      %1852 = vmatprep.mubr.f32.mxu0 %v163
      %1853 = vmatmul.mubr.f32.gmra.mrb[0].mxu0 %v162
      %v1854 = vpop.f32.mrb[0].mxu0
      %v1855 = vadd.f32 %v1710, %v1854
      %v1856 = vpop.f32.mrb[0].mxu0
      %1857 = vmatprep.mubr.f32.mxu0 %v187
      %1858 = vmatmul.mubr.f32.gmra.mrb[0].mxu0 %v186
      %v1859 = vpop.f32.mrb[0].mxu0
      %v1860 = vadd.f32 %v1715, %v1859
      %v1861 = vpop.f32.mrb[0].mxu0
      %1862 = vmatprep.mubr.f32.mxu0 %v211
      %1863 = vmatmul.mubr.f32.gmra.mrb[0].mxu0 %v210
      %v1864 = vpop.f32.mrb[0].mxu0
      %v1865 = vadd.f32 %v1720, %v1864
      %v1866 = vpop.f32.mrb[0].mxu0
      %1867 = vmatprep.mubr.f32.mxu0 %v235
      %1868 = vmatmul.mubr.f32.gmra.mrb[0].mxu0 %v234
      %v1869 = vpop.f32.mrb[0].mxu0
      %v1870 = vadd.f32 %v1725, %v1869
      %v1871 = vpop.f32.mrb[0].mxu0
      %1872 = vmatprep.mubr.f32.mxu0 %v259
      %1873 = vmatmul.mubr.f32.gmra.mrb[0].mxu0 %v258
      %v1874 = vpop.f32.mrb[0].mxu0
      %v1875 = vadd.f32 %v1730, %v1874
      %v1876 = vpop.f32.mrb[0].mxu0
      %1877 = vmatprep.mubr.f32.mxu0 %v283
      %1878 = vmatmul.mubr.f32.gmra.mrb[0].mxu0 %v282
      %v1879 = vpop.f32.mrb[0].mxu0
      %v1880 = vadd.f32 %v1735, %v1879
      %v1881 = vpop.f32.mrb[0].mxu0
      %1882 = vmatprep.mubr.f32.mxu0 %v307
      %1883 = vmatmul.mubr.f32.gmra.mrb[0].mxu0 %v306
      %v1884 = vpop.f32.mrb[0].mxu0
      %v1885 = vadd.f32 %v1740, %v1884
      %v1886 = vpop.f32.mrb[0].mxu0
      %1887 = vmatprep.mubr.f32.mxu0 %v331
      %1888 = vmatmul.mubr.f32.gmra.mrb[0].mxu0 %v330
      %v1889 = vpop.f32.mrb[0].mxu0
      %v1890 = vadd.f32 %v1745, %v1889
      %v1891 = vpop.f32.mrb[0].mxu0
      %1892 = vmatprep.mubr.f32.mxu0 %v355
      %1893 = vmatmul.mubr.f32.gmra.mrb[0].mxu0 %v354
      %v1894 = vpop.f32.mrb[0].mxu0
      %v1895 = vadd.f32 %v1750, %v1894
      %v1896 = vpop.f32.mrb[0].mxu0
      %1897 = vmatprep.mubr.f32.mxu0 %v379
      %1898 = vmatmul.mubr.f32.gmra.mrb[0].mxu0 %v378
      %v1899 = vpop.f32.mrb[0].mxu0
      %v1900 = vadd.f32 %v1755, %v1899
      %v1901 = vpop.f32.mrb[0].mxu0
      %1902 = vmatprep.mubr.f32.mxu0 %v403
      %1903 = vmatmul.mubr.f32.gmra.mrb[0].mxu0 %v402
      %v1904 = vpop.f32.mrb[0].mxu0
      %v1905 = vadd.f32 %v1760, %v1904
      %v1906 = vpop.f32.mrb[0].mxu0
      %1907 = vmatprep.mubr.f32.mxu0 %v427
      %1908 = vmatmul.mubr.f32.gmra.mrb[0].mxu0 %v426
      %v1909 = vpop.f32.mrb[0].mxu0
      %v1910 = vadd.f32 %v1765, %v1909
      %v1911 = vpop.f32.mrb[0].mxu0
      %1912 = vmatprep.mubr.f32.mxu0 %v451
      %1913 = vmatmul.mubr.f32.gmra.mrb[0].mxu0 %v450
      %v1914 = vpop.f32.mrb[0].mxu0
      %v1915 = vadd.f32 %v1770, %v1914
      %v1916 = vpop.f32.mrb[0].mxu0
      %1917 = vmatprep.mubr.f32.mxu0 %v475
      %1918 = vmatmul.mubr.f32.gmra.mrb[0].mxu0 %v474
      %v1919 = vpop.f32.mrb[0].mxu0
      %v1920 = vadd.f32 %v1775, %v1919
      %v1921 = vpop.f32.mrb[0].mxu0
      %1922 = vmatprep.mubr.f32.mxu0 %v499
      %1923 = vmatmul.mubr.f32.gmra.mrb[0].mxu0 %v498
      %v1924 = vpop.f32.mrb[0].mxu0
      %v1925 = vadd.f32 %v1780, %v1924
      %v1926 = vpop.f32.mrb[0].mxu0
      %1927 = vmatprep.mubr.f32.mxu0 %v523
      %1928 = vmatmul.mubr.f32.gmra.mrb[0].mxu0 %v522
      %v1929 = vpop.f32.mrb[0].mxu0
      %v1930 = vadd.f32 %v1785, %v1929
      %v1931 = vpop.f32.mrb[0].mxu0
      %1932 = vdwg.mxu0
      %1933 = vmatprep.subr.mxu0 0.0
      %1934 = vmatpush1.msra.mxu0 %v758
      %1935 = vmatprep.subr.mxu0 0.0
      %1936 = vmatpush1.msra.mxu0 %v759
      %1937 = vmatprep.subr.mxu0 0.0
      %1938 = vmatpush1.msra.mxu0 %v760
      %1939 = vmatprep.subr.mxu0 0.0
      %1940 = vmatpush1.msra.mxu0 %v761
      %1941 = vmatprep.subr.mxu0 0.0
      %1942 = vmatpush1.msra.mxu0 %v762
      %1943 = vmatprep.subr.mxu0 0.0
      %1944 = vmatpush1.msra.mxu0 %v763
      %1945 = vmatprep.subr.mxu0 0.0
      %1946 = vmatpush1.msra.mxu0 %v764
      %1947 = vmatprep.subr.mxu0 0.0
      %1948 = vmatpush1.msra.mxu0 %v765
      %1949 = vmatprep.subr.mxu0 0.0
      %1950 = vmatpush1.msra.mxu0 %v766
      %1951 = vmatprep.subr.mxu0 0.0
      %1952 = vmatpush1.msra.mxu0 %v767
      %1953 = vmatprep.subr.mxu0 0.0
      %1954 = vmatpush1.msra.mxu0 %v768
      %1955 = vmatprep.subr.mxu0 0.0
      %1956 = vmatpush1.msra.mxu0 %v769
      %1957 = vmatprep.subr.mxu0 0.0
      %1958 = vmatpush1.msra.mxu0 %v770
      %1959 = vmatprep.subr.mxu0 0.0
      %1960 = vmatpush1.msra.mxu0 %v771
      %1961 = vmatprep.subr.mxu0 0.0
      %1962 = vmatpush1.msra.mxu0 %v772
      %1963 = vmatprep.subr.mxu0 0.0
      %1964 = vmatpush1.msra.mxu0 %v773
      %1965 = vmatprep.subr.mxu0 0.0
      %1966 = vmatpush1.msra.mxu0 %v774
      %1967 = vmatprep.subr.mxu0 0.0
      %1968 = vmatpush1.msra.mxu0 %v775
      %1969 = vmatprep.subr.mxu0 0.0
      %1970 = vmatpush1.msra.mxu0 %v776
      %1971 = vmatprep.subr.mxu0 0.0
      %1972 = vmatpush1.msra.mxu0 %v777
      %1973 = vmatprep.subr.mxu0 0.0
      %1974 = vmatpush1.msra.mxu0 %v778
      %1975 = vmatprep.subr.mxu0 0.0
      %1976 = vmatpush1.msra.mxu0 %v779
      %1977 = vmatprep.subr.mxu0 0.0
      %1978 = vmatpush1.msra.mxu0 %v780
      %1979 = vmatprep.subr.mxu0 0.0
      %1980 = vmatpush1.msra.mxu0 %v781
      %1981 = vmatprep.subr.mxu0 0.0
      %1982 = vmatpush1.msra.mxu0 %v782
      %1983 = vmatprep.subr.mxu0 0.0
      %1984 = vmatpush1.msra.mxu0 %v783
      %1985 = vmatprep.subr.mxu0 0.0
      %1986 = vmatpush1.msra.mxu0 %v784
      %1987 = vmatprep.subr.mxu0 0.0
      %1988 = vmatpush1.msra.mxu0 %v785
      %1989 = vmatprep.subr.mxu0 0.0
      %1990 = vmatpush1.msra.mxu0 %v786
      %1991 = vmatprep.subr.mxu0 0.0
      %1992 = vmatpush1.msra.mxu0 %v787
      %1993 = vmatprep.subr.mxu0 0.0
      %1994 = vmatpush1.msra.mxu0 %v788
      %1995 = vmatprep.subr.mxu0 0.0
      %1996 = vmatpush1.msra.mxu0 %v789
      %1997 = vmatprep.mubr.f32.mxu0 %v165
      %1998 = vmatmul.mubr.f32.gmra.mrb[0].mxu0 %v164
      %v1999 = vpop.f32.mrb[0].mxu0
      %v2000 = vadd.f32 %v1855, %v1999
      %v2001 = vpop.f32.mrb[0].mxu0
      %2002 = vmatprep.mubr.f32.mxu0 %v189
      %2003 = vmatmul.mubr.f32.gmra.mrb[0].mxu0 %v188
      %v2004 = vpop.f32.mrb[0].mxu0
      %v2005 = vadd.f32 %v1860, %v2004
      %v2006 = vpop.f32.mrb[0].mxu0
      %2007 = vmatprep.mubr.f32.mxu0 %v213
      %2008 = vmatmul.mubr.f32.gmra.mrb[0].mxu0 %v212
      %v2009 = vpop.f32.mrb[0].mxu0
      %v2010 = vadd.f32 %v1865, %v2009
      %v2011 = vpop.f32.mrb[0].mxu0
      %2012 = vmatprep.mubr.f32.mxu0 %v237
      %2013 = vmatmul.mubr.f32.gmra.mrb[0].mxu0 %v236
      %v2014 = vpop.f32.mrb[0].mxu0
      %v2015 = vadd.f32 %v1870, %v2014
      %v2016 = vpop.f32.mrb[0].mxu0
      %2017 = vmatprep.mubr.f32.mxu0 %v261
      %2018 = vmatmul.mubr.f32.gmra.mrb[0].mxu0 %v260
      %v2019 = vpop.f32.mrb[0].mxu0
      %v2020 = vadd.f32 %v1875, %v2019
      %v2021 = vpop.f32.mrb[0].mxu0
      %2022 = vmatprep.mubr.f32.mxu0 %v285
      %2023 = vmatmul.mubr.f32.gmra.mrb[0].mxu0 %v284
      %v2024 = vpop.f32.mrb[0].mxu0
      %v2025 = vadd.f32 %v1880, %v2024
      %v2026 = vpop.f32.mrb[0].mxu0
      %2027 = vmatprep.mubr.f32.mxu0 %v309
      %2028 = vmatmul.mubr.f32.gmra.mrb[0].mxu0 %v308
      %v2029 = vpop.f32.mrb[0].mxu0
      %v2030 = vadd.f32 %v1885, %v2029
      %v2031 = vpop.f32.mrb[0].mxu0
      %2032 = vmatprep.mubr.f32.mxu0 %v333
      %2033 = vmatmul.mubr.f32.gmra.mrb[0].mxu0 %v332
      %v2034 = vpop.f32.mrb[0].mxu0
      %v2035 = vadd.f32 %v1890, %v2034
      %v2036 = vpop.f32.mrb[0].mxu0
      %2037 = vmatprep.mubr.f32.mxu0 %v357
      %2038 = vmatmul.mubr.f32.gmra.mrb[0].mxu0 %v356
      %v2039 = vpop.f32.mrb[0].mxu0
      %v2040 = vadd.f32 %v1895, %v2039
      %v2041 = vpop.f32.mrb[0].mxu0
      %2042 = vmatprep.mubr.f32.mxu0 %v381
      %2043 = vmatmul.mubr.f32.gmra.mrb[0].mxu0 %v380
      %v2044 = vpop.f32.mrb[0].mxu0
      %v2045 = vadd.f32 %v1900, %v2044
      %v2046 = vpop.f32.mrb[0].mxu0
      %2047 = vmatprep.mubr.f32.mxu0 %v405
      %2048 = vmatmul.mubr.f32.gmra.mrb[0].mxu0 %v404
      %v2049 = vpop.f32.mrb[0].mxu0
      %v2050 = vadd.f32 %v1905, %v2049
      %v2051 = vpop.f32.mrb[0].mxu0
      %2052 = vmatprep.mubr.f32.mxu0 %v429
      %2053 = vmatmul.mubr.f32.gmra.mrb[0].mxu0 %v428
      %v2054 = vpop.f32.mrb[0].mxu0
      %v2055 = vadd.f32 %v1910, %v2054
      %v2056 = vpop.f32.mrb[0].mxu0
      %2057 = vmatprep.mubr.f32.mxu0 %v453
      %2058 = vmatmul.mubr.f32.gmra.mrb[0].mxu0 %v452
      %v2059 = vpop.f32.mrb[0].mxu0
      %v2060 = vadd.f32 %v1915, %v2059
      %v2061 = vpop.f32.mrb[0].mxu0
      %2062 = vmatprep.mubr.f32.mxu0 %v477
      %2063 = vmatmul.mubr.f32.gmra.mrb[0].mxu0 %v476
      %v2064 = vpop.f32.mrb[0].mxu0
      %v2065 = vadd.f32 %v1920, %v2064
      %v2066 = vpop.f32.mrb[0].mxu0
      %2067 = vmatprep.mubr.f32.mxu0 %v501
      %2068 = vmatmul.mubr.f32.gmra.mrb[0].mxu0 %v500
      %v2069 = vpop.f32.mrb[0].mxu0
      %v2070 = vadd.f32 %v1925, %v2069
      %v2071 = vpop.f32.mrb[0].mxu0
      %2072 = vmatprep.mubr.f32.mxu0 %v525
      %2073 = vmatmul.mubr.f32.gmra.mrb[0].mxu0 %v524
      %v2074 = vpop.f32.mrb[0].mxu0
      %v2075 = vadd.f32 %v1930, %v2074
      %v2076 = vpop.f32.mrb[0].mxu0
      %2077 = vdwg.mxu0
      %2078 = vmatprep.subr.mxu0 0.0
      %2079 = vmatpush1.msra.mxu0 %v790
      %2080 = vmatprep.subr.mxu0 0.0
      %2081 = vmatpush1.msra.mxu0 %v791
      %2082 = vmatprep.subr.mxu0 0.0
      %2083 = vmatpush1.msra.mxu0 %v792
      %2084 = vmatprep.subr.mxu0 0.0
      %2085 = vmatpush1.msra.mxu0 %v793
      %2086 = vmatprep.subr.mxu0 0.0
      %2087 = vmatpush1.msra.mxu0 %v794
      %2088 = vmatprep.subr.mxu0 0.0
      %2089 = vmatpush1.msra.mxu0 %v795
      %2090 = vmatprep.subr.mxu0 0.0
      %2091 = vmatpush1.msra.mxu0 %v796
      %2092 = vmatprep.subr.mxu0 0.0
      %2093 = vmatpush1.msra.mxu0 %v797
      %2094 = vmatprep.subr.mxu0 0.0
      %2095 = vmatpush1.msra.mxu0 %v798
      %2096 = vmatprep.subr.mxu0 0.0
      %2097 = vmatpush1.msra.mxu0 %v799
      %2098 = vmatprep.subr.mxu0 0.0
      %2099 = vmatpush1.msra.mxu0 %v800
      %2100 = vmatprep.subr.mxu0 0.0
      %2101 = vmatpush1.msra.mxu0 %v801
      %2102 = vmatprep.subr.mxu0 0.0
      %2103 = vmatpush1.msra.mxu0 %v802
      %2104 = vmatprep.subr.mxu0 0.0
      %2105 = vmatpush1.msra.mxu0 %v803
      %2106 = vmatprep.subr.mxu0 0.0
      %2107 = vmatpush1.msra.mxu0 %v804
      %2108 = vmatprep.subr.mxu0 0.0
      %2109 = vmatpush1.msra.mxu0 %v805
      %2110 = vmatprep.subr.mxu0 0.0
      %2111 = vmatpush1.msra.mxu0 %v806
      %2112 = vmatprep.subr.mxu0 0.0
      %2113 = vmatpush1.msra.mxu0 %v807
      %2114 = vmatprep.subr.mxu0 0.0
      %2115 = vmatpush1.msra.mxu0 %v808
      %2116 = vmatprep.subr.mxu0 0.0
      %2117 = vmatpush1.msra.mxu0 %v809
      %2118 = vmatprep.subr.mxu0 0.0
      %2119 = vmatpush1.msra.mxu0 %v810
      %2120 = vmatprep.subr.mxu0 0.0
      %2121 = vmatpush1.msra.mxu0 %v811
      %2122 = vmatprep.subr.mxu0 0.0
      %2123 = vmatpush1.msra.mxu0 %v812
      %2124 = vmatprep.subr.mxu0 0.0
      %2125 = vmatpush1.msra.mxu0 %v813
      %2126 = vmatprep.subr.mxu0 0.0
      %2127 = vmatpush1.msra.mxu0 %v814
      %2128 = vmatprep.subr.mxu0 0.0
      %2129 = vmatpush1.msra.mxu0 %v815
      %2130 = vmatprep.subr.mxu0 0.0
      %2131 = vmatpush1.msra.mxu0 %v816
      %2132 = vmatprep.subr.mxu0 0.0
      %2133 = vmatpush1.msra.mxu0 %v817
      %2134 = vmatprep.subr.mxu0 0.0
      %2135 = vmatpush1.msra.mxu0 %v818
      %2136 = vmatprep.subr.mxu0 0.0
      %2137 = vmatpush1.msra.mxu0 %v819
      %2138 = vmatprep.subr.mxu0 0.0
      %2139 = vmatpush1.msra.mxu0 %v820
      %2140 = vmatprep.subr.mxu0 0.0
      %2141 = vmatpush1.msra.mxu0 %v821
      %2142 = vmatprep.mubr.f32.mxu0 %v167
      %2143 = vmatmul.mubr.f32.gmra.mrb[0].mxu0 %v166
      %v2144 = vpop.f32.mrb[0].mxu0
      %v2145 = vadd.f32 %v2000, %v2144
      %v2146 = vpop.f32.mrb[0].mxu0
      %2147 = vmatprep.mubr.f32.mxu0 %v191
      %2148 = vmatmul.mubr.f32.gmra.mrb[0].mxu0 %v190
      %v2149 = vpop.f32.mrb[0].mxu0
      %v2150 = vadd.f32 %v2005, %v2149
      %v2151 = vpop.f32.mrb[0].mxu0
      %2152 = vmatprep.mubr.f32.mxu0 %v215
      %2153 = vmatmul.mubr.f32.gmra.mrb[0].mxu0 %v214
      %v2154 = vpop.f32.mrb[0].mxu0
      %v2155 = vadd.f32 %v2010, %v2154
      %v2156 = vpop.f32.mrb[0].mxu0
      %2157 = vmatprep.mubr.f32.mxu0 %v239
      %2158 = vmatmul.mubr.f32.gmra.mrb[0].mxu0 %v238
      %v2159 = vpop.f32.mrb[0].mxu0
      %v2160 = vadd.f32 %v2015, %v2159
      %v2161 = vpop.f32.mrb[0].mxu0
      %2162 = vmatprep.mubr.f32.mxu0 %v263
      %2163 = vmatmul.mubr.f32.gmra.mrb[0].mxu0 %v262
      %v2164 = vpop.f32.mrb[0].mxu0
      %v2165 = vadd.f32 %v2020, %v2164
      %v2166 = vpop.f32.mrb[0].mxu0
      %2167 = vmatprep.mubr.f32.mxu0 %v287
      %2168 = vmatmul.mubr.f32.gmra.mrb[0].mxu0 %v286
      %v2169 = vpop.f32.mrb[0].mxu0
      %v2170 = vadd.f32 %v2025, %v2169
      %v2171 = vpop.f32.mrb[0].mxu0
      %2172 = vmatprep.mubr.f32.mxu0 %v311
      %2173 = vmatmul.mubr.f32.gmra.mrb[0].mxu0 %v310
      %v2174 = vpop.f32.mrb[0].mxu0
      %v2175 = vadd.f32 %v2030, %v2174
      %v2176 = vpop.f32.mrb[0].mxu0
      %2177 = vmatprep.mubr.f32.mxu0 %v335
      %2178 = vmatmul.mubr.f32.gmra.mrb[0].mxu0 %v334
      %v2179 = vpop.f32.mrb[0].mxu0
      %v2180 = vadd.f32 %v2035, %v2179
      %v2181 = vpop.f32.mrb[0].mxu0
      %2182 = vmatprep.mubr.f32.mxu0 %v359
      %2183 = vmatmul.mubr.f32.gmra.mrb[0].mxu0 %v358
      %v2184 = vpop.f32.mrb[0].mxu0
      %v2185 = vadd.f32 %v2040, %v2184
      %v2186 = vpop.f32.mrb[0].mxu0
      %2187 = vmatprep.mubr.f32.mxu0 %v383
      %2188 = vmatmul.mubr.f32.gmra.mrb[0].mxu0 %v382
      %v2189 = vpop.f32.mrb[0].mxu0
      %v2190 = vadd.f32 %v2045, %v2189
      %v2191 = vpop.f32.mrb[0].mxu0
      %2192 = vmatprep.mubr.f32.mxu0 %v407
      %2193 = vmatmul.mubr.f32.gmra.mrb[0].mxu0 %v406
      %v2194 = vpop.f32.mrb[0].mxu0
      %v2195 = vadd.f32 %v2050, %v2194
      %v2196 = vpop.f32.mrb[0].mxu0
      %2197 = vmatprep.mubr.f32.mxu0 %v431
      %2198 = vmatmul.mubr.f32.gmra.mrb[0].mxu0 %v430
      %v2199 = vpop.f32.mrb[0].mxu0
      %v2200 = vadd.f32 %v2055, %v2199
      %v2201 = vpop.f32.mrb[0].mxu0
      %2202 = vmatprep.mubr.f32.mxu0 %v455
      %2203 = vmatmul.mubr.f32.gmra.mrb[0].mxu0 %v454
      %v2204 = vpop.f32.mrb[0].mxu0
      %v2205 = vadd.f32 %v2060, %v2204
      %v2206 = vpop.f32.mrb[0].mxu0
      %2207 = vmatprep.mubr.f32.mxu0 %v479
      %2208 = vmatmul.mubr.f32.gmra.mrb[0].mxu0 %v478
      %v2209 = vpop.f32.mrb[0].mxu0
      %v2210 = vadd.f32 %v2065, %v2209
      %v2211 = vpop.f32.mrb[0].mxu0
      %2212 = vmatprep.mubr.f32.mxu0 %v503
      %2213 = vmatmul.mubr.f32.gmra.mrb[0].mxu0 %v502
      %v2214 = vpop.f32.mrb[0].mxu0
      %v2215 = vadd.f32 %v2070, %v2214
      %v2216 = vpop.f32.mrb[0].mxu0
      %2217 = vmatprep.mubr.f32.mxu0 %v527
      %2218 = vmatmul.mubr.f32.gmra.mrb[0].mxu0 %v526
      %v2219 = vpop.f32.mrb[0].mxu0
      %v2220 = vadd.f32 %v2075, %v2219
      %v2221 = vpop.f32.mrb[0].mxu0
      %2222 = vdwg.mxu0
      %2223 = vmatprep.subr.mxu0 0.0
      %2224 = vmatpush1.msra.mxu0 %v822
      %2225 = vmatprep.subr.mxu0 0.0
      %2226 = vmatpush1.msra.mxu0 %v823
      %2227 = vmatprep.subr.mxu0 0.0
      %2228 = vmatpush1.msra.mxu0 %v824
      %2229 = vmatprep.subr.mxu0 0.0
      %2230 = vmatpush1.msra.mxu0 %v825
      %2231 = vmatprep.subr.mxu0 0.0
      %2232 = vmatpush1.msra.mxu0 %v826
      %2233 = vmatprep.subr.mxu0 0.0
      %2234 = vmatpush1.msra.mxu0 %v827
      %2235 = vmatprep.subr.mxu0 0.0
      %2236 = vmatpush1.msra.mxu0 %v828
      %2237 = vmatprep.subr.mxu0 0.0
      %2238 = vmatpush1.msra.mxu0 %v829
      %2239 = vmatprep.subr.mxu0 0.0
      %2240 = vmatpush1.msra.mxu0 %v830
      %2241 = vmatprep.subr.mxu0 0.0
      %2242 = vmatpush1.msra.mxu0 %v831
      %2243 = vmatprep.subr.mxu0 0.0
      %2244 = vmatpush1.msra.mxu0 %v832
      %2245 = vmatprep.subr.mxu0 0.0
      %2246 = vmatpush1.msra.mxu0 %v833
      %2247 = vmatprep.subr.mxu0 0.0
      %2248 = vmatpush1.msra.mxu0 %v834
      %2249 = vmatprep.subr.mxu0 0.0
      %2250 = vmatpush1.msra.mxu0 %v835
      %2251 = vmatprep.subr.mxu0 0.0
      %2252 = vmatpush1.msra.mxu0 %v836
      %2253 = vmatprep.subr.mxu0 0.0
      %2254 = vmatpush1.msra.mxu0 %v837
      %2255 = vmatprep.subr.mxu0 0.0
      %2256 = vmatpush1.msra.mxu0 %v838
      %2257 = vmatprep.subr.mxu0 0.0
      %2258 = vmatpush1.msra.mxu0 %v839
      %2259 = vmatprep.subr.mxu0 0.0
      %2260 = vmatpush1.msra.mxu0 %v840
      %2261 = vmatprep.subr.mxu0 0.0
      %2262 = vmatpush1.msra.mxu0 %v841
      %2263 = vmatprep.subr.mxu0 0.0
      %2264 = vmatpush1.msra.mxu0 %v842
      %2265 = vmatprep.subr.mxu0 0.0
      %2266 = vmatpush1.msra.mxu0 %v843
      %2267 = vmatprep.subr.mxu0 0.0
      %2268 = vmatpush1.msra.mxu0 %v844
      %2269 = vmatprep.subr.mxu0 0.0
      %2270 = vmatpush1.msra.mxu0 %v845
      %2271 = vmatprep.subr.mxu0 0.0
      %2272 = vmatpush1.msra.mxu0 %v846
      %2273 = vmatprep.subr.mxu0 0.0
      %2274 = vmatpush1.msra.mxu0 %v847
      %2275 = vmatprep.subr.mxu0 0.0
      %2276 = vmatpush1.msra.mxu0 %v848
      %2277 = vmatprep.subr.mxu0 0.0
      %2278 = vmatpush1.msra.mxu0 %v849
      %2279 = vmatprep.subr.mxu0 0.0
      %2280 = vmatpush1.msra.mxu0 %v850
      %2281 = vmatprep.subr.mxu0 0.0
      %2282 = vmatpush1.msra.mxu0 %v851
      %2283 = vmatprep.subr.mxu0 0.0
      %2284 = vmatpush1.msra.mxu0 %v852
      %2285 = vmatprep.subr.mxu0 0.0
      %2286 = vmatpush1.msra.mxu0 %v853
      %2287 = vmatprep.mubr.f32.mxu0 %v169
      %2288 = vmatmul.mubr.f32.gmra.mrb[0].mxu0 %v168
      %v2289 = vpop.f32.mrb[0].mxu0
      %v2290 = vadd.f32 %v2145, %v2289
      %v2291 = vpop.f32.mrb[0].mxu0
      %2292 = vmatprep.mubr.f32.mxu0 %v193
      %2293 = vmatmul.mubr.f32.gmra.mrb[0].mxu0 %v192
      %v2294 = vpop.f32.mrb[0].mxu0
      %v2295 = vadd.f32 %v2150, %v2294
      %v2296 = vpop.f32.mrb[0].mxu0
      %2297 = vmatprep.mubr.f32.mxu0 %v217
      %2298 = vmatmul.mubr.f32.gmra.mrb[0].mxu0 %v216
      %v2299 = vpop.f32.mrb[0].mxu0
      %v2300 = vadd.f32 %v2155, %v2299
      %v2301 = vpop.f32.mrb[0].mxu0
      %2302 = vmatprep.mubr.f32.mxu0 %v241
      %2303 = vmatmul.mubr.f32.gmra.mrb[0].mxu0 %v240
      %v2304 = vpop.f32.mrb[0].mxu0
      %v2305 = vadd.f32 %v2160, %v2304
      %v2306 = vpop.f32.mrb[0].mxu0
      %2307 = vmatprep.mubr.f32.mxu0 %v265
      %2308 = vmatmul.mubr.f32.gmra.mrb[0].mxu0 %v264
      %v2309 = vpop.f32.mrb[0].mxu0
      %v2310 = vadd.f32 %v2165, %v2309
      %v2311 = vpop.f32.mrb[0].mxu0
      %2312 = vmatprep.mubr.f32.mxu0 %v289
      %2313 = vmatmul.mubr.f32.gmra.mrb[0].mxu0 %v288
      %v2314 = vpop.f32.mrb[0].mxu0
      %v2315 = vadd.f32 %v2170, %v2314
      %v2316 = vpop.f32.mrb[0].mxu0
      %2317 = vmatprep.mubr.f32.mxu0 %v313
      %2318 = vmatmul.mubr.f32.gmra.mrb[0].mxu0 %v312
      %v2319 = vpop.f32.mrb[0].mxu0
      %v2320 = vadd.f32 %v2175, %v2319
      %v2321 = vpop.f32.mrb[0].mxu0
      %2322 = vmatprep.mubr.f32.mxu0 %v337
      %2323 = vmatmul.mubr.f32.gmra.mrb[0].mxu0 %v336
      %v2324 = vpop.f32.mrb[0].mxu0
      %v2325 = vadd.f32 %v2180, %v2324
      %v2326 = vpop.f32.mrb[0].mxu0
      %2327 = vmatprep.mubr.f32.mxu0 %v361
      %2328 = vmatmul.mubr.f32.gmra.mrb[0].mxu0 %v360
      %v2329 = vpop.f32.mrb[0].mxu0
      %v2330 = vadd.f32 %v2185, %v2329
      %v2331 = vpop.f32.mrb[0].mxu0
      %2332 = vmatprep.mubr.f32.mxu0 %v385
      %2333 = vmatmul.mubr.f32.gmra.mrb[0].mxu0 %v384
      %v2334 = vpop.f32.mrb[0].mxu0
      %v2335 = vadd.f32 %v2190, %v2334
      %v2336 = vpop.f32.mrb[0].mxu0
      %2337 = vmatprep.mubr.f32.mxu0 %v409
      %2338 = vmatmul.mubr.f32.gmra.mrb[0].mxu0 %v408
      %v2339 = vpop.f32.mrb[0].mxu0
      %v2340 = vadd.f32 %v2195, %v2339
      %v2341 = vpop.f32.mrb[0].mxu0
      %2342 = vmatprep.mubr.f32.mxu0 %v433
      %2343 = vmatmul.mubr.f32.gmra.mrb[0].mxu0 %v432
      %v2344 = vpop.f32.mrb[0].mxu0
      %v2345 = vadd.f32 %v2200, %v2344
      %v2346 = vpop.f32.mrb[0].mxu0
      %2347 = vmatprep.mubr.f32.mxu0 %v457
      %2348 = vmatmul.mubr.f32.gmra.mrb[0].mxu0 %v456
      %v2349 = vpop.f32.mrb[0].mxu0
      %v2350 = vadd.f32 %v2205, %v2349
      %v2351 = vpop.f32.mrb[0].mxu0
      %2352 = vmatprep.mubr.f32.mxu0 %v481
      %2353 = vmatmul.mubr.f32.gmra.mrb[0].mxu0 %v480
      %v2354 = vpop.f32.mrb[0].mxu0
      %v2355 = vadd.f32 %v2210, %v2354
      %v2356 = vpop.f32.mrb[0].mxu0
      %2357 = vmatprep.mubr.f32.mxu0 %v505
      %2358 = vmatmul.mubr.f32.gmra.mrb[0].mxu0 %v504
      %v2359 = vpop.f32.mrb[0].mxu0
      %v2360 = vadd.f32 %v2215, %v2359
      %v2361 = vpop.f32.mrb[0].mxu0
      %2362 = vmatprep.mubr.f32.mxu0 %v529
      %2363 = vmatmul.mubr.f32.gmra.mrb[0].mxu0 %v528
      %v2364 = vpop.f32.mrb[0].mxu0
      %v2365 = vadd.f32 %v2220, %v2364
      %v2366 = vpop.f32.mrb[0].mxu0
      %2367 = vdwg.mxu0
      %2368 = vmatprep.subr.mxu0 0.0
      %2369 = vmatpush1.msra.mxu0 %v854
      %2370 = vmatprep.subr.mxu0 0.0
      %2371 = vmatpush1.msra.mxu0 %v855
      %2372 = vmatprep.subr.mxu0 0.0
      %2373 = vmatpush1.msra.mxu0 %v856
      %2374 = vmatprep.subr.mxu0 0.0
      %2375 = vmatpush1.msra.mxu0 %v857
      %2376 = vmatprep.subr.mxu0 0.0
      %2377 = vmatpush1.msra.mxu0 %v858
      %2378 = vmatprep.subr.mxu0 0.0
      %2379 = vmatpush1.msra.mxu0 %v859
      %2380 = vmatprep.subr.mxu0 0.0
      %2381 = vmatpush1.msra.mxu0 %v860
      %2382 = vmatprep.subr.mxu0 0.0
      %2383 = vmatpush1.msra.mxu0 %v861
      %2384 = vmatprep.subr.mxu0 0.0
      %2385 = vmatpush1.msra.mxu0 %v862
      %2386 = vmatprep.subr.mxu0 0.0
      %2387 = vmatpush1.msra.mxu0 %v863
      %2388 = vmatprep.subr.mxu0 0.0
      %2389 = vmatpush1.msra.mxu0 %v864
      %2390 = vmatprep.subr.mxu0 0.0
      %2391 = vmatpush1.msra.mxu0 %v865
      %2392 = vmatprep.subr.mxu0 0.0
      %2393 = vmatpush1.msra.mxu0 %v866
      %2394 = vmatprep.subr.mxu0 0.0
      %2395 = vmatpush1.msra.mxu0 %v867
      %2396 = vmatprep.subr.mxu0 0.0
      %2397 = vmatpush1.msra.mxu0 %v868
      %2398 = vmatprep.subr.mxu0 0.0
      %2399 = vmatpush1.msra.mxu0 %v869
      %2400 = vmatprep.subr.mxu0 0.0
      %2401 = vmatpush1.msra.mxu0 %v870
      %2402 = vmatprep.subr.mxu0 0.0
      %2403 = vmatpush1.msra.mxu0 %v871
      %2404 = vmatprep.subr.mxu0 0.0
      %2405 = vmatpush1.msra.mxu0 %v872
      %2406 = vmatprep.subr.mxu0 0.0
      %2407 = vmatpush1.msra.mxu0 %v873
      %2408 = vmatprep.subr.mxu0 0.0
      %2409 = vmatpush1.msra.mxu0 %v874
      %2410 = vmatprep.subr.mxu0 0.0
      %2411 = vmatpush1.msra.mxu0 %v875
      %2412 = vmatprep.subr.mxu0 0.0
      %2413 = vmatpush1.msra.mxu0 %v876
      %2414 = vmatprep.subr.mxu0 0.0
      %2415 = vmatpush1.msra.mxu0 %v877
      %2416 = vmatprep.subr.mxu0 0.0
      %2417 = vmatpush1.msra.mxu0 %v878
      %2418 = vmatprep.subr.mxu0 0.0
      %2419 = vmatpush1.msra.mxu0 %v879
      %2420 = vmatprep.subr.mxu0 0.0
      %2421 = vmatpush1.msra.mxu0 %v880
      %2422 = vmatprep.subr.mxu0 0.0
      %2423 = vmatpush1.msra.mxu0 %v881
      %2424 = vmatprep.subr.mxu0 0.0
      %2425 = vmatpush1.msra.mxu0 %v882
      %2426 = vmatprep.subr.mxu0 0.0
      %2427 = vmatpush1.msra.mxu0 %v883
      %2428 = vmatprep.subr.mxu0 0.0
      %2429 = vmatpush1.msra.mxu0 %v884
      %2430 = vmatprep.subr.mxu0 0.0
      %2431 = vmatpush1.msra.mxu0 %v885
      %2432 = vmatprep.mubr.f32.mxu0 %v171
      %2433 = vmatmul.mubr.f32.gmra.mrb[0].mxu0 %v170
      %v2434 = vpop.f32.mrb[0].mxu0
      %v2435 = vadd.f32 %v2290, %v2434
      %v2436 = vpop.f32.mrb[0].mxu0
      %2437 = vmatprep.mubr.f32.mxu0 %v195
      %2438 = vmatmul.mubr.f32.gmra.mrb[0].mxu0 %v194
      %v2439 = vpop.f32.mrb[0].mxu0
      %v2440 = vadd.f32 %v2295, %v2439
      %v2441 = vpop.f32.mrb[0].mxu0
      %2442 = vmatprep.mubr.f32.mxu0 %v219
      %2443 = vmatmul.mubr.f32.gmra.mrb[0].mxu0 %v218
      %v2444 = vpop.f32.mrb[0].mxu0
      %v2445 = vadd.f32 %v2300, %v2444
      %v2446 = vpop.f32.mrb[0].mxu0
      %2447 = vmatprep.mubr.f32.mxu0 %v243
      %2448 = vmatmul.mubr.f32.gmra.mrb[0].mxu0 %v242
      %v2449 = vpop.f32.mrb[0].mxu0
      %v2450 = vadd.f32 %v2305, %v2449
      %v2451 = vpop.f32.mrb[0].mxu0
      %2452 = vmatprep.mubr.f32.mxu0 %v267
      %2453 = vmatmul.mubr.f32.gmra.mrb[0].mxu0 %v266
      %v2454 = vpop.f32.mrb[0].mxu0
      %v2455 = vadd.f32 %v2310, %v2454
      %v2456 = vpop.f32.mrb[0].mxu0
      %2457 = vmatprep.mubr.f32.mxu0 %v291
      %2458 = vmatmul.mubr.f32.gmra.mrb[0].mxu0 %v290
      %v2459 = vpop.f32.mrb[0].mxu0
      %v2460 = vadd.f32 %v2315, %v2459
      %v2461 = vpop.f32.mrb[0].mxu0
      %2462 = vmatprep.mubr.f32.mxu0 %v315
      %2463 = vmatmul.mubr.f32.gmra.mrb[0].mxu0 %v314
      %v2464 = vpop.f32.mrb[0].mxu0
      %v2465 = vadd.f32 %v2320, %v2464
      %v2466 = vpop.f32.mrb[0].mxu0
      %2467 = vmatprep.mubr.f32.mxu0 %v339
      %2468 = vmatmul.mubr.f32.gmra.mrb[0].mxu0 %v338
      %v2469 = vpop.f32.mrb[0].mxu0
      %v2470 = vadd.f32 %v2325, %v2469
      %v2471 = vpop.f32.mrb[0].mxu0
      %2472 = vmatprep.mubr.f32.mxu0 %v363
      %2473 = vmatmul.mubr.f32.gmra.mrb[0].mxu0 %v362
      %v2474 = vpop.f32.mrb[0].mxu0
      %v2475 = vadd.f32 %v2330, %v2474
      %v2476 = vpop.f32.mrb[0].mxu0
      %2477 = vmatprep.mubr.f32.mxu0 %v387
      %2478 = vmatmul.mubr.f32.gmra.mrb[0].mxu0 %v386
      %v2479 = vpop.f32.mrb[0].mxu0
      %v2480 = vadd.f32 %v2335, %v2479
      %v2481 = vpop.f32.mrb[0].mxu0
      %2482 = vmatprep.mubr.f32.mxu0 %v411
      %2483 = vmatmul.mubr.f32.gmra.mrb[0].mxu0 %v410
      %v2484 = vpop.f32.mrb[0].mxu0
      %v2485 = vadd.f32 %v2340, %v2484
      %v2486 = vpop.f32.mrb[0].mxu0
      %2487 = vmatprep.mubr.f32.mxu0 %v435
      %2488 = vmatmul.mubr.f32.gmra.mrb[0].mxu0 %v434
      %v2489 = vpop.f32.mrb[0].mxu0
      %v2490 = vadd.f32 %v2345, %v2489
      %v2491 = vpop.f32.mrb[0].mxu0
      %2492 = vmatprep.mubr.f32.mxu0 %v459
      %2493 = vmatmul.mubr.f32.gmra.mrb[0].mxu0 %v458
      %v2494 = vpop.f32.mrb[0].mxu0
      %v2495 = vadd.f32 %v2350, %v2494
      %v2496 = vpop.f32.mrb[0].mxu0
      %2497 = vmatprep.mubr.f32.mxu0 %v483
      %2498 = vmatmul.mubr.f32.gmra.mrb[0].mxu0 %v482
      %v2499 = vpop.f32.mrb[0].mxu0
      %v2500 = vadd.f32 %v2355, %v2499
      %v2501 = vpop.f32.mrb[0].mxu0
      %2502 = vmatprep.mubr.f32.mxu0 %v507
      %2503 = vmatmul.mubr.f32.gmra.mrb[0].mxu0 %v506
      %v2504 = vpop.f32.mrb[0].mxu0
      %v2505 = vadd.f32 %v2360, %v2504
      %v2506 = vpop.f32.mrb[0].mxu0
      %2507 = vmatprep.mubr.f32.mxu0 %v531
      %2508 = vmatmul.mubr.f32.gmra.mrb[0].mxu0 %v530
      %v2509 = vpop.f32.mrb[0].mxu0
      %v2510 = vadd.f32 %v2365, %v2509
      %v2511 = vpop.f32.mrb[0].mxu0
      %2512 = vdwg.mxu0
      %2513 = vmatprep.subr.mxu0 0.0
      %2514 = vmatpush1.msra.mxu0 %v886
      %2515 = vmatprep.subr.mxu0 0.0
      %2516 = vmatpush1.msra.mxu0 %v887
      %2517 = vmatprep.subr.mxu0 0.0
      %2518 = vmatpush1.msra.mxu0 %v888
      %2519 = vmatprep.subr.mxu0 0.0
      %2520 = vmatpush1.msra.mxu0 %v889
      %2521 = vmatprep.subr.mxu0 0.0
      %2522 = vmatpush1.msra.mxu0 %v890
      %2523 = vmatprep.subr.mxu0 0.0
      %2524 = vmatpush1.msra.mxu0 %v891
      %2525 = vmatprep.subr.mxu0 0.0
      %2526 = vmatpush1.msra.mxu0 %v892
      %2527 = vmatprep.subr.mxu0 0.0
      %2528 = vmatpush1.msra.mxu0 %v893
      %2529 = vmatprep.subr.mxu0 0.0
      %2530 = vmatpush1.msra.mxu0 %v894
      %2531 = vmatprep.subr.mxu0 0.0
      %2532 = vmatpush1.msra.mxu0 %v895
      %2533 = vmatprep.subr.mxu0 0.0
      %2534 = vmatpush1.msra.mxu0 %v896
      %2535 = vmatprep.subr.mxu0 0.0
      %2536 = vmatpush1.msra.mxu0 %v897
      %2537 = vmatprep.subr.mxu0 0.0
      %2538 = vmatpush1.msra.mxu0 %v898
      %2539 = vmatprep.subr.mxu0 0.0
      %2540 = vmatpush1.msra.mxu0 %v899
      %2541 = vmatprep.subr.mxu0 0.0
      %2542 = vmatpush1.msra.mxu0 %v900
      %2543 = vmatprep.subr.mxu0 0.0
      %2544 = vmatpush1.msra.mxu0 %v901
      %2545 = vmatprep.subr.mxu0 0.0
      %2546 = vmatpush1.msra.mxu0 %v902
      %2547 = vmatprep.subr.mxu0 0.0
      %2548 = vmatpush1.msra.mxu0 %v903
      %2549 = vmatprep.subr.mxu0 0.0
      %2550 = vmatpush1.msra.mxu0 %v904
      %2551 = vmatprep.subr.mxu0 0.0
      %2552 = vmatpush1.msra.mxu0 %v905
      %2553 = vmatprep.subr.mxu0 0.0
      %2554 = vmatpush1.msra.mxu0 %v906
      %2555 = vmatprep.subr.mxu0 0.0
      %2556 = vmatpush1.msra.mxu0 %v907
      %2557 = vmatprep.subr.mxu0 0.0
      %2558 = vmatpush1.msra.mxu0 %v908
      %2559 = vmatprep.subr.mxu0 0.0
      %2560 = vmatpush1.msra.mxu0 %v909
      %2561 = vmatprep.subr.mxu0 0.0
      %2562 = vmatpush1.msra.mxu0 %v910
      %2563 = vmatprep.subr.mxu0 0.0
      %2564 = vmatpush1.msra.mxu0 %v911
      %2565 = vmatprep.subr.mxu0 0.0
      %2566 = vmatpush1.msra.mxu0 %v912
      %2567 = vmatprep.subr.mxu0 0.0
      %2568 = vmatpush1.msra.mxu0 %v913
      %2569 = vmatprep.subr.mxu0 0.0
      %2570 = vmatpush1.msra.mxu0 %v914
      %2571 = vmatprep.subr.mxu0 0.0
      %2572 = vmatpush1.msra.mxu0 %v915
      %2573 = vmatprep.subr.mxu0 0.0
      %2574 = vmatpush1.msra.mxu0 %v916
      %2575 = vmatprep.subr.mxu0 0.0
      %2576 = vmatpush1.msra.mxu0 %v917
      %2577 = vmatprep.mubr.f32.mxu0 %v173
      %2578 = vmatmul.mubr.f32.gmra.mrb[0].mxu0 %v172
      %v2579 = vpop.f32.mrb[0].mxu0
      %v2580 = vadd.f32 %v2435, %v2579
      %v2581 = vpop.f32.mrb[0].mxu0
      %2582 = vmatprep.mubr.f32.mxu0 %v197
      %2583 = vmatmul.mubr.f32.gmra.mrb[0].mxu0 %v196
      %v2584 = vpop.f32.mrb[0].mxu0
      %v2585 = vadd.f32 %v2440, %v2584
      %v2586 = vpop.f32.mrb[0].mxu0
      %2587 = vmatprep.mubr.f32.mxu0 %v221
      %2588 = vmatmul.mubr.f32.gmra.mrb[0].mxu0 %v220
      %v2589 = vpop.f32.mrb[0].mxu0
      %v2590 = vadd.f32 %v2445, %v2589
      %v2591 = vpop.f32.mrb[0].mxu0
      %2592 = vmatprep.mubr.f32.mxu0 %v245
      %2593 = vmatmul.mubr.f32.gmra.mrb[0].mxu0 %v244
      %v2594 = vpop.f32.mrb[0].mxu0
      %v2595 = vadd.f32 %v2450, %v2594
      %v2596 = vpop.f32.mrb[0].mxu0
      %2597 = vmatprep.mubr.f32.mxu0 %v269
      %2598 = vmatmul.mubr.f32.gmra.mrb[0].mxu0 %v268
      %v2599 = vpop.f32.mrb[0].mxu0
      %v2600 = vadd.f32 %v2455, %v2599
      %v2601 = vpop.f32.mrb[0].mxu0
      %2602 = vmatprep.mubr.f32.mxu0 %v293
      %2603 = vmatmul.mubr.f32.gmra.mrb[0].mxu0 %v292
      %v2604 = vpop.f32.mrb[0].mxu0
      %v2605 = vadd.f32 %v2460, %v2604
      %v2606 = vpop.f32.mrb[0].mxu0
      %2607 = vmatprep.mubr.f32.mxu0 %v317
      %2608 = vmatmul.mubr.f32.gmra.mrb[0].mxu0 %v316
      %v2609 = vpop.f32.mrb[0].mxu0
      %v2610 = vadd.f32 %v2465, %v2609
      %v2611 = vpop.f32.mrb[0].mxu0
      %2612 = vmatprep.mubr.f32.mxu0 %v341
      %2613 = vmatmul.mubr.f32.gmra.mrb[0].mxu0 %v340
      %v2614 = vpop.f32.mrb[0].mxu0
      %v2615 = vadd.f32 %v2470, %v2614
      %v2616 = vpop.f32.mrb[0].mxu0
      %2617 = vmatprep.mubr.f32.mxu0 %v365
      %2618 = vmatmul.mubr.f32.gmra.mrb[0].mxu0 %v364
      %v2619 = vpop.f32.mrb[0].mxu0
      %v2620 = vadd.f32 %v2475, %v2619
      %v2621 = vpop.f32.mrb[0].mxu0
      %2622 = vmatprep.mubr.f32.mxu0 %v389
      %2623 = vmatmul.mubr.f32.gmra.mrb[0].mxu0 %v388
      %v2624 = vpop.f32.mrb[0].mxu0
      %v2625 = vadd.f32 %v2480, %v2624
      %v2626 = vpop.f32.mrb[0].mxu0
      %2627 = vmatprep.mubr.f32.mxu0 %v413
      %2628 = vmatmul.mubr.f32.gmra.mrb[0].mxu0 %v412
      %v2629 = vpop.f32.mrb[0].mxu0
      %v2630 = vadd.f32 %v2485, %v2629
      %v2631 = vpop.f32.mrb[0].mxu0
      %2632 = vmatprep.mubr.f32.mxu0 %v437
      %2633 = vmatmul.mubr.f32.gmra.mrb[0].mxu0 %v436
      %v2634 = vpop.f32.mrb[0].mxu0
      %v2635 = vadd.f32 %v2490, %v2634
      %v2636 = vpop.f32.mrb[0].mxu0
      %2637 = vmatprep.mubr.f32.mxu0 %v461
      %2638 = vmatmul.mubr.f32.gmra.mrb[0].mxu0 %v460
      %v2639 = vpop.f32.mrb[0].mxu0
      %v2640 = vadd.f32 %v2495, %v2639
      %v2641 = vpop.f32.mrb[0].mxu0
      %2642 = vmatprep.mubr.f32.mxu0 %v485
      %2643 = vmatmul.mubr.f32.gmra.mrb[0].mxu0 %v484
      %v2644 = vpop.f32.mrb[0].mxu0
      %v2645 = vadd.f32 %v2500, %v2644
      %v2646 = vpop.f32.mrb[0].mxu0
      %2647 = vmatprep.mubr.f32.mxu0 %v509
      %2648 = vmatmul.mubr.f32.gmra.mrb[0].mxu0 %v508
      %v2649 = vpop.f32.mrb[0].mxu0
      %v2650 = vadd.f32 %v2505, %v2649
      %v2651 = vpop.f32.mrb[0].mxu0
      %2652 = vmatprep.mubr.f32.mxu0 %v533
      %2653 = vmatmul.mubr.f32.gmra.mrb[0].mxu0 %v532
      %v2654 = vpop.f32.mrb[0].mxu0
      %v2655 = vadd.f32 %v2510, %v2654
      %v2656 = vpop.f32.mrb[0].mxu0
      %2657 = vdwg.mxu0
      %vm2658 = vcmask 400384
      %2659 = vst.msk [vmem:[%s148] sm:$0xff] %vm2658, %v2580
      %2660 = vst.msk [vmem:[%s148 + $0x8] sm:$0xff] %vm2658, %v2585
      %2661 = vst.msk [vmem:[%s148 + $0x10] sm:$0xff] %vm2658, %v2590
      %2662 = vst.msk [vmem:[%s148 + $0x18] sm:$0xff] %vm2658, %v2595
      %2663 = vst.msk [vmem:[%s148 + $0x20] sm:$0xff] %vm2658, %v2600
      %2664 = vst.msk [vmem:[%s148 + $0x28] sm:$0xff] %vm2658, %v2605
      %2665 = vst.msk [vmem:[%s148 + $0x30] sm:$0xff] %vm2658, %v2610
      %2666 = vst.msk [vmem:[%s148 + $0x38] sm:$0xff] %vm2658, %v2615
      %2667 = vst.msk [vmem:[%s148 + $0x40] sm:$0xff] %vm2658, %v2620
      %2668 = vst.msk [vmem:[%s148 + $0x48] sm:$0xff] %vm2658, %v2625
      %2669 = vst.msk [vmem:[%s148 + $0x50] sm:$0xff] %vm2658, %v2630
      %2670 = vst.msk [vmem:[%s148 + $0x58] sm:$0xff] %vm2658, %v2635
      %2671 = vst.msk [vmem:[%s148 + $0x60] sm:$0xff] %vm2658, %v2640
      %2672 = vst.msk [vmem:[%s148 + $0x68] sm:$0xff] %vm2658, %v2645
      %2673 = vst.msk [vmem:[%s148 + $0x70] sm:$0xff] %vm2658, %v2650
      %2674 = vst.msk [vmem:[%s148 + $0x78] sm:$0xff] %vm2658, %v2655
      %s2675 = smul.u32 16, %s13
      %p2676 = scmp.lt.s32.totalorder %s2675, 63
      %s2677 = scalar_select %p2676, %s2675, 63
      %s2678 = smul.addr %s2677, 8
      %s2679 = scalar_lea.vmem %s2, %s2678
      // Predicated region
      $region29: #{kernel_generated_6_forward.1} parent=27 // pred_check
        %p2680 = pneg %p78
      $region30: #{kernel_generated_6_forward.1} parent=27 // pred_check_branch
        %2682 = sbr.rel (%p2680) target = $region32
      $region31: #{kernel_generated_6_forward.1} parent=27 // pred_region
        %s2683 = smul.u32 16, %s13
      $region32: #{kernel_generated_6_forward.1} parent=27 // pred_fallthru
        _
    $region28: #{kernel_generated_6_forward.1} parent=5 // pred_fallthru
      _
    %p2684 = scmp.le.s32.totalorder 2, %s8
    // Predicated region
    $region33: #{kernel_generated_6_forward.1} parent=5 // pred_check
      %p2685 = pneg %p2684
    $region34: #{kernel_generated_6_forward.1} parent=5 // pred_check_branch
      %2687 = sbr.rel (%p2685) target = $region36
    $region35: #{kernel_generated_6_forward.1} parent=5 // pred_region
      %s2688 = ssub.s32 %s8, 2
      // Predicated region
      $region37: #{kernel_generated_6_forward.1} parent=35 // pred_check
        %p2689 = pneg %p84
      $region38: #{kernel_generated_6_forward.1} parent=35 // pred_check_branch
        %2691 = sbr.rel (%p2689) target = $region40
      $region39: #{kernel_generated_6_forward.1} parent=35 // pred_region
        %s2692 = smul.u32 16, %s14
        %p2693 = scmp.lt.s32.totalorder %s2692, 63
        %s2694 = scalar_select %p2693, %s2692, 63
        %s2695 = smul.addr %s2694, 8
        %s2696 = scalar_lea.vmem %s2, %s2695
      $region40: #{kernel_generated_6_forward.1} parent=35 // pred_fallthru
        _
    $region36: #{kernel_generated_6_forward.1} parent=5 // pred_fallthru
      _
  $region6: #{kernel_generated_6_forward.1} parent=0 // loop_footer
    %s12 = sadd.s32 1, %s8
  $region7: #{kernel_generated_6_forward.1} parent=0 // loop_footer_branch
    %7 = sbr.rel target = $region3
  $region8: #{kernel_generated_6_forward.1} parent=0 // loop_exit
    _

</llo_original>
